<compile_context>
chip_gen: v7x
topology: tpu7x:2x2x1
jax: 0.10.0
libtpu: 0.0.40
codegen_flags: <defaults>
</compile_context>

<pallas_src>
import functools

import jax
import jax.numpy as jnp
from jax.experimental import pallas as pl
from jax.experimental.pallas import tpu as pltpu


# ---------------------------------------------------------------------------
# Fused conv3x3(dilated) + folded-BN affine + ReLU kernel
# ---------------------------------------------------------------------------
def _make_rebnconv_kernel(tile_h, w_out, cin, cout, dil, fuse_taps):
    """One grid step computes a (tile_h, W, Cout) output tile for one batch image."""

    def kernel(x_ref, w_ref, scale_ref, bias_ref, o_ref):
        j = pl.program_id(1)
        row0 = pl.multiple_of(j * tile_h, tile_h)

        # Load only the rows this tile needs (tile rows + dilated 3x3 halo).
        xt = x_ref[0, pl.ds(row0, tile_h + 2 * dil), :, :]       # (tile_h+2d, Wp, Cin) bf16

        # 9 shifted (tile_h, W, Cin) windows of the padded input.
        wins = [xt[ki * dil:ki * dil + tile_h, kj * dil:kj * dil + w_out, :]
                for ki in range(3) for kj in range(3)]

        if fuse_taps:
            # im2col inside the kernel: one MXU matmul over the full 9*Cin contraction.
            patches = jnp.concatenate(wins, axis=-1)             # (tile_h, W, 9*Cin) bf16
            patches = patches.reshape(tile_h * w_out, 9 * cin)
            acc = jnp.dot(patches, w_ref[...],
                          preferred_element_type=jnp.float32)    # (tile_h*W, Cout) f32
        else:
            # Fallback (per-tap dots) for Mosaic versions without unaligned
            # minor-dim concatenation support.
            wmat = w_ref[...]
            acc = jnp.zeros((tile_h * w_out, cout), jnp.float32)
            for t, win in enumerate(wins):
                acc = acc + jnp.dot(win.reshape(tile_h * w_out, cin),
                                    wmat[t * cin:(t + 1) * cin, :],
                                    preferred_element_type=jnp.float32)

        # Folded-BN affine + ReLU epilogue in f32 (VPU).
        y = jnp.maximum(acc * scale_ref[...] + bias_ref[...], 0.0)
        o_ref[0] = y.reshape(tile_h, w_out, cout).astype(o_ref.dtype)

    return kernel


def _pick_tile_h(h, w_out, cout):
    """Largest 8-aligned divisor of H whose f32 accumulator fits ~16 vregs,
    preferring >= 2 row tiles so the pipeline / 2 TensorCores have work to split."""
    acc_limit = 16 * 1024                               # 16 vregs worth of f32
    cands = [t for t in range(h, 0, -1) if h % t == 0 and (t % 8 == 0 or t == h)]
    for t in cands:
        if t * w_out * cout <= acc_limit and (t < h or len(cands) == 1):
            return t
    return cands[-1]


def _vmem_limit_bytes(hp, wp, cin, tile_h, w_out, cout):
    x_block = hp * wp * cin * 2                         # resident padded input (bf16)
    w_bytes = 9 * cin * cout * 2 + 2 * cout * 4         # folded weights + scale/bias
    out_block = tile_h * w_out * cout * 4               # f32 output tile
    work = tile_h * w_out * (9 * cin * 2 + 2 * cout * 4)  # im2col operand + acc temps
    est = 2 * (x_block + w_bytes + out_block) + work
    # Raise above v5e's 16 MiB scoped default, never above v7x's 64 MiB physical.
    return int(min(64 * 1024 * 1024, max(32 * 1024 * 1024, 2 * est)))


def rebnconv_forward(x_nchw, params, *, dirate=1, fuse_taps=True):
    """REBNCONV forward: relu(bn(conv3x3_dilated(x))). x is NCHW like PyTorch."""
    n, cin, h, w = x_nchw.shape
    d = int(dirate)
    cout = params["w"].shape[-1]

    # NCHW -> NHWC, pad once by the dilation, cast to bf16 (MXU-native input).
    x = jnp.transpose(x_nchw, (0, 2, 3, 1))
    x = jnp.pad(x, ((0, 0), (d, d), (d, d), (0, 0))).astype(jnp.bfloat16)
    hp, wp = h + 2 * d, w + 2 * d

    tile_h = _pick_tile_h(h, w, cout)
    kernel = _make_rebnconv_kernel(tile_h, w, cin, cout, d, fuse_taps)

    flops = 2 * n * h * w * 9 * cin * cout
    bytes_accessed = n * hp * wp * cin * 2 + 9 * cin * cout * 2 + n * h * w * cout * 4

    out = pl.pallas_call(
        kernel,
        out_shape=jax.ShapeDtypeStruct((n, h, w, cout), jnp.float32),
        grid=(n, h // tile_h),
        in_specs=[
            # Padded input stays resident for a whole batch element: all row tiles
            # (and their 3x3 halos) read it from VMEM, it is DMA'd from HBM once.
            pl.BlockSpec((1, hp, wp, cin), lambda i, j: (i, 0, 0, 0)),
            pl.BlockSpec((9 * cin, cout), lambda i, j: (0, 0)),
            pl.BlockSpec((1, cout), lambda i, j: (0, 0)),
            pl.BlockSpec((1, cout), lambda i, j: (0, 0)),
        ],
        out_specs=pl.BlockSpec((1, tile_h, w, cout), lambda i, j: (i, j, 0, 0)),
        compiler_params=pltpu.CompilerParams(
            dimension_semantics=("parallel", "parallel"),
            vmem_limit_bytes=_vmem_limit_bytes(hp, wp, cin, tile_h, w, cout)),
        cost_estimate=pl.CostEstimate(flops=int(flops), transcendentals=0,
                                      bytes_accessed=int(bytes_accessed)),
    )(x, params["w"], params["scale"], params["bias"])

    return jnp.transpose(out, (0, 3, 1, 2))             # NHWC -> NCHW


# ---------------------------------------------------------------------------
# Parameter construction (PyTorch-layout raw params -> folded kernel params)
# ---------------------------------------------------------------------------
def init_rebnconv_params(key, in_ch, out_ch):
    ks = jax.random.split(key, 6)
    conv_w = jax.random.normal(ks[0], (out_ch, in_ch, 3, 3), jnp.float32) / jnp.sqrt(9.0 * in_ch)
    conv_b = 0.02 * jax.random.normal(ks[1], (out_ch,), jnp.float32)
    gamma = 1.0 + 0.1 * jax.random.normal(ks[2], (out_ch,), jnp.float32)
    beta = 0.05 * jax.random.normal(ks[3], (out_ch,), jnp.float32)
    mean = 0.05 * jax.random.normal(ks[4], (out_ch,), jnp.float32)
    var = 0.9 + 0.2 * jax.random.uniform(ks[5], (out_ch,), jnp.float32)
    return {"conv_w": conv_w, "conv_b": conv_b, "gamma": gamma, "beta": beta,
            "mean": mean, "var": var}


def fold_rebnconv_params(raw, eps=1e-5):
    """Fold BatchNorm (eval mode) into an affine epilogue; reorder conv weights into
    the (9*Cin, Cout) im2col matrix (tap-major, Cin-minor) expected by the kernel."""
    scale = raw["gamma"] / jnp.sqrt(raw["var"] + eps)
    bias = raw["beta"] + (raw["conv_b"] - raw["mean"]) * scale
    cout, cin = raw["conv_w"].shape[:2]
    w_mat = jnp.transpose(raw["conv_w"], (2, 3, 1, 0)).reshape(9 * cin, cout)
    return {"w": w_mat.astype(jnp.bfloat16),
            "scale": scale.reshape(1, cout).astype(jnp.float32),
            "bias": bias.reshape(1, cout).astype(jnp.float32)}


# ---------------------------------------------------------------------------
# Plain-JAX reference (same folded-BN eval semantics, same bf16 conv inputs)
# ---------------------------------------------------------------------------
def rebnconv_reference(x_nchw, raw, dirate, eps=1e-5):
    d = int(dirate)
    y = jax.lax.conv_general_dilated(
        x_nchw.astype(jnp.bfloat16), raw["conv_w"].astype(jnp.bfloat16),
        window_strides=(1, 1), padding=((d, d), (d, d)), rhs_dilation=(d, d),
        dimension_numbers=("NCHW", "OIHW", "NCHW"),
        preferred_element_type=jnp.float32)
    s = raw["gamma"] / jnp.sqrt(raw["var"] + eps)
    b = raw["beta"] + (raw["conv_b"] - raw["mean"]) * s
    y = y * s[None, :, None, None] + b[None, :, None, None]
    return jnp.maximum(y, 0.0)


def _run(x, params, dirate):
    try:
        out = jax.jit(functools.partial(rebnconv_forward, dirate=dirate,
                                        fuse_taps=True))(x, params)
        jax.block_until_ready(out)
        return out
    except Exception:
        # Fallback for Mosaic versions lacking unaligned minor-dim concatenation.
        out = jax.jit(functools.partial(rebnconv_forward, dirate=dirate,
                                        fuse_taps=False))(x, params)
        jax.block_until_ready(out)
        return out


if __name__ == "__main__":
    key = jax.random.PRNGKey(0)
    k_x, k_p1, k_p2 = jax.random.split(key, 3)

    N, IN_CH, OUT_CH, H, W = 2, 4, 16, 16, 16
    x = jax.random.normal(k_x, (N, IN_CH, H, W), jnp.float32)     # NCHW, like PyTorch

    raw1 = init_rebnconv_params(k_p1, IN_CH, OUT_CH)              # REBNCONV(dirate=1)
    raw2 = init_rebnconv_params(k_p2, IN_CH, OUT_CH)              # REBNCONV(dirate=2)
    p1 = fold_rebnconv_params(raw1)
    p2 = fold_rebnconv_params(raw2)

    out1 = _run(x, p1, dirate=1)
    out2 = _run(x, p2, dirate=2)

    assert out1.shape == (N, OUT_CH, H, W), out1.shape
    assert out2.shape == (N, OUT_CH, H, W), out2.shape
    assert bool(jnp.all(jnp.isfinite(out1))) and bool(jnp.all(jnp.isfinite(out2)))

    ref1 = rebnconv_reference(x, raw1, 1)
    ref2 = rebnconv_reference(x, raw2, 2)
    err1 = float(jnp.max(jnp.abs(out1 - ref1)))
    err2 = float(jnp.max(jnp.abs(out2 - ref2)))
    assert err1 < 2e-2 and err2 < 2e-2, (err1, err2)

    print("KERNEL_OK")
</pallas_src>

<mosaic_0001>
module attributes {stable_mosaic.version = 11 : i64} {
  func.func @kernel(%arg0: i32, %arg1: i32, %arg2: memref<1x18x18x4xbf16, #tpu.memory_space<vmem>>, %arg3: memref<36x16xbf16, #tpu.memory_space<vmem>>, %arg4: memref<1x16xf32, #tpu.memory_space<vmem>>, %arg5: memref<1x16xf32, #tpu.memory_space<vmem>>, %arg6: memref<1x8x16x16xf32, #tpu.memory_space<vmem>>) attributes {dimension_semantics = [#tpu.dimension_semantics<parallel>, #tpu.dimension_semantics<parallel>], iteration_bounds = array<i64: 2, 2>, scalar_prefetch = 0 : i64, scratch_operands = 0 : i64, tpu.core_type = #tpu.core_type<tc>, window_params = [{transform_indices = @transform_0, window_bounds = array<i64: 1, 18, 18, 4>}, {pipeline_mode = #tpu.pipeline_mode<synchronous>, transform_indices = @transform_1, window_bounds = array<i64: 36, 16>}, {pipeline_mode = #tpu.pipeline_mode<synchronous>, transform_indices = @transform_2, window_bounds = array<i64: 1, 16>}, {pipeline_mode = #tpu.pipeline_mode<synchronous>, transform_indices = @transform_3, window_bounds = array<i64: 1, 16>}, {transform_indices = @transform_4, window_bounds = array<i64: 1, 8, 16, 16>}]} {
    %c8_i32 = arith.constant 8 : i32
    %0 = arith.muli %arg1, %c8_i32 : i32
    %1 = tpu.assume_multiple %0, 8 : i32
    %c0 = arith.constant 0 : index
    %2 = arith.index_cast %1 : i32 to index
    %c0_0 = arith.constant 0 : index
    %c0_1 = arith.constant 0 : index
    %3 = vector.load %arg2[%c0, %2, %c0_0, %c0_1] : memref<1x18x18x4xbf16, #tpu.memory_space<vmem>>, vector<1x10x18x4xbf16>
    %4 = vector.shape_cast %3 : vector<1x10x18x4xbf16> to vector<10x18x4xbf16>
    %5 = vector.extract_strided_slice %4 {offsets = [0, 0, 0], sizes = [8, 16, 4], strides = [1, 1, 1]} : vector<10x18x4xbf16> to vector<8x16x4xbf16>
    %6 = vector.extract_strided_slice %4 {offsets = [0, 1, 0], sizes = [8, 16, 4], strides = [1, 1, 1]} : vector<10x18x4xbf16> to vector<8x16x4xbf16>
    %7 = vector.extract_strided_slice %4 {offsets = [0, 2, 0], sizes = [8, 16, 4], strides = [1, 1, 1]} : vector<10x18x4xbf16> to vector<8x16x4xbf16>
    %8 = vector.extract_strided_slice %4 {offsets = [1, 0, 0], sizes = [8, 16, 4], strides = [1, 1, 1]} : vector<10x18x4xbf16> to vector<8x16x4xbf16>
    %9 = vector.extract_strided_slice %4 {offsets = [1, 1, 0], sizes = [8, 16, 4], strides = [1, 1, 1]} : vector<10x18x4xbf16> to vector<8x16x4xbf16>
    %10 = vector.extract_strided_slice %4 {offsets = [1, 2, 0], sizes = [8, 16, 4], strides = [1, 1, 1]} : vector<10x18x4xbf16> to vector<8x16x4xbf16>
    %11 = vector.extract_strided_slice %4 {offsets = [2, 0, 0], sizes = [8, 16, 4], strides = [1, 1, 1]} : vector<10x18x4xbf16> to vector<8x16x4xbf16>
    %12 = vector.extract_strided_slice %4 {offsets = [2, 1, 0], sizes = [8, 16, 4], strides = [1, 1, 1]} : vector<10x18x4xbf16> to vector<8x16x4xbf16>
    %13 = vector.extract_strided_slice %4 {offsets = [2, 2, 0], sizes = [8, 16, 4], strides = [1, 1, 1]} : vector<10x18x4xbf16> to vector<8x16x4xbf16>
    %14 = tpu.concatenate %5, %6, %7, %8, %9, %10, %11, %12, %13 in 2 : vector<8x16x4xbf16>, vector<8x16x4xbf16>, vector<8x16x4xbf16>, vector<8x16x4xbf16>, vector<8x16x4xbf16>, vector<8x16x4xbf16>, vector<8x16x4xbf16>, vector<8x16x4xbf16>, vector<8x16x4xbf16> -> vector<8x16x36xbf16>
    %15 = vector.shape_cast %14 : vector<8x16x36xbf16> to vector<128x36xbf16>
    %c0_2 = arith.constant 0 : index
    %c0_3 = arith.constant 0 : index
    %16 = vector.load %arg3[%c0_2, %c0_3] : memref<36x16xbf16, #tpu.memory_space<vmem>>, vector<36x16xbf16>
    %cst = arith.constant dense<0.000000e+00> : vector<128x16xf32>
    %17 = tpu.matmul %15, %16, %cst {dimension_numbers = #tpu.dot_dimension_numbers<[1], [0], [0], [1], [0, 0, 1, 1], [], []>} : vector<128x36xbf16>, vector<36x16xbf16>, vector<128x16xf32> -> vector<128x16xf32>
    %c0_4 = arith.constant 0 : index
    %c0_5 = arith.constant 0 : index
    %18 = vector.load %arg4[%c0_4, %c0_5] : memref<1x16xf32, #tpu.memory_space<vmem>>, vector<1x16xf32>
    %19 = vector.broadcast %18 : vector<1x16xf32> to vector<128x16xf32>
    %20 = arith.mulf %17, %19 : vector<128x16xf32>
    %c0_6 = arith.constant 0 : index
    %c0_7 = arith.constant 0 : index
    %21 = vector.load %arg5[%c0_6, %c0_7] : memref<1x16xf32, #tpu.memory_space<vmem>>, vector<1x16xf32>
    %22 = vector.broadcast %21 : vector<1x16xf32> to vector<128x16xf32>
    %23 = arith.addf %20, %22 : vector<128x16xf32>
    %cst_8 = arith.constant 0.000000e+00 : f32
    %24 = vector.broadcast %cst_8 : f32 to vector<128x16xf32>
    %25 = arith.maximumf %23, %24 : vector<128x16xf32>
    %26 = vector.shape_cast %25 : vector<128x16xf32> to vector<8x16x16xf32>
    %c0_9 = arith.constant 0 : index
    %c0_10 = arith.constant 0 : index
    %c0_11 = arith.constant 0 : index
    %c0_12 = arith.constant 0 : index
    %27 = vector.load %arg6[%c0_9, %c0_10, %c0_11, %c0_12] : memref<1x8x16x16xf32, #tpu.memory_space<vmem>>, vector<1x8x16x16xf32>
    %28 = vector.shape_cast %27 : vector<1x8x16x16xf32> to vector<8x16x16xf32>
    %29 = vector.shape_cast %26 : vector<8x16x16xf32> to vector<1x8x16x16xf32>
    tpu.vector_store %arg6[%c0_9, %c0_10, %c0_11, %c0_12], %29 {strides = array<i32>} : memref<1x8x16x16xf32, #tpu.memory_space<vmem>>, vector<1x8x16x16xf32>,
    return
  }
  func.func @transform_0(%arg0: i32, %arg1: i32) -> (i32, i32, i32, i32) {
    %c0_i32 = arith.constant 0 : i32
    %c0_i32_0 = arith.constant 0 : i32
    %c0_i32_1 = arith.constant 0 : i32
    %c0_i32_2 = arith.constant 0 : i32
    return %arg0, %c0_i32, %c0_i32_0, %c0_i32_1 : i32, i32, i32, i32
  }
  func.func @transform_1(%arg0: i32, %arg1: i32) -> (i32, i32) {
    %c0_i32 = arith.constant 0 : i32
    %c0_i32_0 = arith.constant 0 : i32
    %c0_i32_1 = arith.constant 0 : i32
    return %c0_i32, %c0_i32_0 : i32, i32
  }
  func.func @transform_2(%arg0: i32, %arg1: i32) -> (i32, i32) {
    %c0_i32 = arith.constant 0 : i32
    %c0_i32_0 = arith.constant 0 : i32
    %c0_i32_1 = arith.constant 0 : i32
    return %c0_i32, %c0_i32_0 : i32, i32
  }
  func.func @transform_3(%arg0: i32, %arg1: i32) -> (i32, i32) {
    %c0_i32 = arith.constant 0 : i32
    %c0_i32_0 = arith.constant 0 : i32
    %c0_i32_1 = arith.constant 0 : i32
    return %c0_i32, %c0_i32_0 : i32, i32
  }
  func.func @transform_4(%arg0: i32, %arg1: i32) -> (i32, i32, i32, i32) {
    %c0_i32 = arith.constant 0 : i32
    %c0_i32_0 = arith.constant 0 : i32
    %c0_i32_1 = arith.constant 0 : i32
    return %arg0, %arg1, %c0_i32, %c0_i32_0 : i32, i32, i32, i32
  }
}

module attributes {stable_mosaic.version = 11 : i64} {
  func.func @kernel(%arg0: i32, %arg1: i32, %arg2: memref<1x18x18x4xbf16, #tpu.memory_space<vmem>>, %arg3: memref<36x16xbf16, #tpu.memory_space<vmem>>, %arg4: memref<1x16xf32, #tpu.memory_space<vmem>>, %arg5: memref<1x16xf32, #tpu.memory_space<vmem>>, %arg6: memref<1x8x16x16xf32, #tpu.memory_space<vmem>>) attributes {dimension_semantics = [#tpu.dimension_semantics<parallel>, #tpu.dimension_semantics<parallel>], iteration_bounds = array<i64: 2, 2>, scalar_prefetch = 0 : i64, scratch_operands = 0 : i64, tpu.core_type = #tpu.core_type<tc>, window_params = [{transform_indices = @transform_0, window_bounds = array<i64: 1, 18, 18, 4>}, {pipeline_mode = #tpu.pipeline_mode<synchronous>, transform_indices = @transform_1, window_bounds = array<i64: 36, 16>}, {pipeline_mode = #tpu.pipeline_mode<synchronous>, transform_indices = @transform_2, window_bounds = array<i64: 1, 16>}, {pipeline_mode = #tpu.pipeline_mode<synchronous>, transform_indices = @transform_3, window_bounds = array<i64: 1, 16>}, {transform_indices = @transform_4, window_bounds = array<i64: 1, 8, 16, 16>}]} {
    %c8_i32 = arith.constant 8 : i32
    %0 = arith.muli %arg1, %c8_i32 : i32
    %1 = tpu.assume_multiple %0, 8 : i32
    %c0 = arith.constant 0 : index
    %2 = arith.index_cast %1 : i32 to index
    %c0_0 = arith.constant 0 : index
    %c0_1 = arith.constant 0 : index
    %3 = vector.load %arg2[%c0, %2, %c0_0, %c0_1] : memref<1x18x18x4xbf16, #tpu.memory_space<vmem>>, vector<1x10x18x4xbf16>
    %4 = vector.shape_cast %3 : vector<1x10x18x4xbf16> to vector<10x18x4xbf16>
    %5 = vector.extract_strided_slice %4 {offsets = [0, 0, 0], sizes = [8, 16, 4], strides = [1, 1, 1]} : vector<10x18x4xbf16> to vector<8x16x4xbf16>
    %6 = vector.extract_strided_slice %4 {offsets = [0, 1, 0], sizes = [8, 16, 4], strides = [1, 1, 1]} : vector<10x18x4xbf16> to vector<8x16x4xbf16>
    %7 = vector.extract_strided_slice %4 {offsets = [0, 2, 0], sizes = [8, 16, 4], strides = [1, 1, 1]} : vector<10x18x4xbf16> to vector<8x16x4xbf16>
    %8 = vector.extract_strided_slice %4 {offsets = [1, 0, 0], sizes = [8, 16, 4], strides = [1, 1, 1]} : vector<10x18x4xbf16> to vector<8x16x4xbf16>
    %9 = vector.extract_strided_slice %4 {offsets = [1, 1, 0], sizes = [8, 16, 4], strides = [1, 1, 1]} : vector<10x18x4xbf16> to vector<8x16x4xbf16>
    %10 = vector.extract_strided_slice %4 {offsets = [1, 2, 0], sizes = [8, 16, 4], strides = [1, 1, 1]} : vector<10x18x4xbf16> to vector<8x16x4xbf16>
    %11 = vector.extract_strided_slice %4 {offsets = [2, 0, 0], sizes = [8, 16, 4], strides = [1, 1, 1]} : vector<10x18x4xbf16> to vector<8x16x4xbf16>
    %12 = vector.extract_strided_slice %4 {offsets = [2, 1, 0], sizes = [8, 16, 4], strides = [1, 1, 1]} : vector<10x18x4xbf16> to vector<8x16x4xbf16>
    %13 = vector.extract_strided_slice %4 {offsets = [2, 2, 0], sizes = [8, 16, 4], strides = [1, 1, 1]} : vector<10x18x4xbf16> to vector<8x16x4xbf16>
    %c0_2 = arith.constant 0 : index
    %c0_3 = arith.constant 0 : index
    %14 = vector.load %arg3[%c0_2, %c0_3] : memref<36x16xbf16, #tpu.memory_space<vmem>>, vector<36x16xbf16>
    %cst = arith.constant 0.000000e+00 : f32
    %15 = vector.broadcast %cst : f32 to vector<128x16xf32>
    %16 = vector.shape_cast %5 : vector<8x16x4xbf16> to vector<128x4xbf16>
    %17 = vector.extract_strided_slice %14 {offsets = [0, 0], sizes = [4, 16], strides = [1, 1]} : vector<36x16xbf16> to vector<4x16xbf16>
    %cst_4 = arith.constant dense<0.000000e+00> : vector<128x16xf32>
    %18 = tpu.matmul %16, %17, %cst_4 {dimension_numbers = #tpu.dot_dimension_numbers<[1], [0], [0], [1], [0, 0, 1, 1], [], []>} : vector<128x4xbf16>, vector<4x16xbf16>, vector<128x16xf32> -> vector<128x16xf32>
    %19 = arith.addf %15, %18 : vector<128x16xf32>
    %20 = vector.shape_cast %6 : vector<8x16x4xbf16> to vector<128x4xbf16>
    %21 = vector.extract_strided_slice %14 {offsets = [4, 0], sizes = [4, 16], strides = [1, 1]} : vector<36x16xbf16> to vector<4x16xbf16>
    %cst_5 = arith.constant dense<0.000000e+00> : vector<128x16xf32>
    %22 = tpu.matmul %20, %21, %cst_5 {dimension_numbers = #tpu.dot_dimension_numbers<[1], [0], [0], [1], [0, 0, 1, 1], [], []>} : vector<128x4xbf16>, vector<4x16xbf16>, vector<128x16xf32> -> vector<128x16xf32>
    %23 = arith.addf %19, %22 : vector<128x16xf32>
    %24 = vector.shape_cast %7 : vector<8x16x4xbf16> to vector<128x4xbf16>
    %25 = vector.extract_strided_slice %14 {offsets = [8, 0], sizes = [4, 16], strides = [1, 1]} : vector<36x16xbf16> to vector<4x16xbf16>
    %cst_6 = arith.constant dense<0.000000e+00> : vector<128x16xf32>
    %26 = tpu.matmul %24, %25, %cst_6 {dimension_numbers = #tpu.dot_dimension_numbers<[1], [0], [0], [1], [0, 0, 1, 1], [], []>} : vector<128x4xbf16>, vector<4x16xbf16>, vector<128x16xf32> -> vector<128x16xf32>
    %27 = arith.addf %23, %26 : vector<128x16xf32>
    %28 = vector.shape_cast %8 : vector<8x16x4xbf16> to vector<128x4xbf16>
    %29 = vector.extract_strided_slice %14 {offsets = [12, 0], sizes = [4, 16], strides = [1, 1]} : vector<36x16xbf16> to vector<4x16xbf16>
    %cst_7 = arith.constant dense<0.000000e+00> : vector<128x16xf32>
    %30 = tpu.matmul %28, %29, %cst_7 {dimension_numbers = #tpu.dot_dimension_numbers<[1], [0], [0], [1], [0, 0, 1, 1], [], []>} : vector<128x4xbf16>, vector<4x16xbf16>, vector<128x16xf32> -> vector<128x16xf32>
    %31 = arith.addf %27, %30 : vector<128x16xf32>
    %32 = vector.shape_cast %9 : vector<8x16x4xbf16> to vector<128x4xbf16>
    %33 = vector.extract_strided_slice %14 {offsets = [16, 0], sizes = [4, 16], strides = [1, 1]} : vector<36x16xbf16> to vector<4x16xbf16>
    %cst_8 = arith.constant dense<0.000000e+00> : vector<128x16xf32>
    %34 = tpu.matmul %32, %33, %cst_8 {dimension_numbers = #tpu.dot_dimension_numbers<[1], [0], [0], [1], [0, 0, 1, 1], [], []>} : vector<128x4xbf16>, vector<4x16xbf16>, vector<128x16xf32> -> vector<128x16xf32>
    %35 = arith.addf %31, %34 : vector<128x16xf32>
    %36 = vector.shape_cast %10 : vector<8x16x4xbf16> to vector<128x4xbf16>
    %37 = vector.extract_strided_slice %14 {offsets = [20, 0], sizes = [4, 16], strides = [1, 1]} : vector<36x16xbf16> to vector<4x16xbf16>
    %cst_9 = arith.constant dense<0.000000e+00> : vector<128x16xf32>
    %38 = tpu.matmul %36, %37, %cst_9 {dimension_numbers = #tpu.dot_dimension_numbers<[1], [0], [0], [1], [0, 0, 1, 1], [], []>} : vector<128x4xbf16>, vector<4x16xbf16>, vector<128x16xf32> -> vector<128x16xf32>
    %39 = arith.addf %35, %38 : vector<128x16xf32>
    %40 = vector.shape_cast %11 : vector<8x16x4xbf16> to vector<128x4xbf16>
    %41 = vector.extract_strided_slice %14 {offsets = [24, 0], sizes = [4, 16], strides = [1, 1]} : vector<36x16xbf16> to vector<4x16xbf16>
    %cst_10 = arith.constant dense<0.000000e+00> : vector<128x16xf32>
    %42 = tpu.matmul %40, %41, %cst_10 {dimension_numbers = #tpu.dot_dimension_numbers<[1], [0], [0], [1], [0, 0, 1, 1], [], []>} : vector<128x4xbf16>, vector<4x16xbf16>, vector<128x16xf32> -> vector<128x16xf32>
    %43 = arith.addf %39, %42 : vector<128x16xf32>
    %44 = vector.shape_cast %12 : vector<8x16x4xbf16> to vector<128x4xbf16>
    %45 = vector.extract_strided_slice %14 {offsets = [28, 0], sizes = [4, 16], strides = [1, 1]} : vector<36x16xbf16> to vector<4x16xbf16>
    %cst_11 = arith.constant dense<0.000000e+00> : vector<128x16xf32>
    %46 = tpu.matmul %44, %45, %cst_11 {dimension_numbers = #tpu.dot_dimension_numbers<[1], [0], [0], [1], [0, 0, 1, 1], [], []>} : vector<128x4xbf16>, vector<4x16xbf16>, vector<128x16xf32> -> vector<128x16xf32>
    %47 = arith.addf %43, %46 : vector<128x16xf32>
    %48 = vector.shape_cast %13 : vector<8x16x4xbf16> to vector<128x4xbf16>
    %49 = vector.extract_strided_slice %14 {offsets = [32, 0], sizes = [4, 16], strides = [1, 1]} : vector<36x16xbf16> to vector<4x16xbf16>
    %cst_12 = arith.constant dense<0.000000e+00> : vector<128x16xf32>
    %50 = tpu.matmul %48, %49, %cst_12 {dimension_numbers = #tpu.dot_dimension_numbers<[1], [0], [0], [1], [0, 0, 1, 1], [], []>} : vector<128x4xbf16>, vector<4x16xbf16>, vector<128x16xf32> -> vector<128x16xf32>
    %51 = arith.addf %47, %50 : vector<128x16xf32>
    %c0_13 = arith.constant 0 : index
    %c0_14 = arith.constant 0 : index
    %52 = vector.load %arg4[%c0_13, %c0_14] : memref<1x16xf32, #tpu.memory_space<vmem>>, vector<1x16xf32>
    %53 = vector.broadcast %52 : vector<1x16xf32> to vector<128x16xf32>
    %54 = arith.mulf %51, %53 : vector<128x16xf32>
    %c0_15 = arith.constant 0 : index
    %c0_16 = arith.constant 0 : index
    %55 = vector.load %arg5[%c0_15, %c0_16] : memref<1x16xf32, #tpu.memory_space<vmem>>, vector<1x16xf32>
    %56 = vector.broadcast %55 : vector<1x16xf32> to vector<128x16xf32>
    %57 = arith.addf %54, %56 : vector<128x16xf32>
    %cst_17 = arith.constant 0.000000e+00 : f32
    %58 = vector.broadcast %cst_17 : f32 to vector<128x16xf32>
    %59 = arith.maximumf %57, %58 : vector<128x16xf32>
    %60 = vector.shape_cast %59 : vector<128x16xf32> to vector<8x16x16xf32>
    %c0_18 = arith.constant 0 : index
    %c0_19 = arith.constant 0 : index
    %c0_20 = arith.constant 0 : index
    %c0_21 = arith.constant 0 : index
    %61 = vector.load %arg6[%c0_18, %c0_19, %c0_20, %c0_21] : memref<1x8x16x16xf32, #tpu.memory_space<vmem>>, vector<1x8x16x16xf32>
    %62 = vector.shape_cast %61 : vector<1x8x16x16xf32> to vector<8x16x16xf32>
    %63 = vector.shape_cast %60 : vector<8x16x16xf32> to vector<1x8x16x16xf32>
    tpu.vector_store %arg6[%c0_18, %c0_19, %c0_20, %c0_21], %63 {strides = array<i32>} : memref<1x8x16x16xf32, #tpu.memory_space<vmem>>, vector<1x8x16x16xf32>,
    return
  }
  func.func @transform_0(%arg0: i32, %arg1: i32) -> (i32, i32, i32, i32) {
    %c0_i32 = arith.constant 0 : i32
    %c0_i32_0 = arith.constant 0 : i32
    %c0_i32_1 = arith.constant 0 : i32
    %c0_i32_2 = arith.constant 0 : i32
    return %arg0, %c0_i32, %c0_i32_0, %c0_i32_1 : i32, i32, i32, i32
  }
  func.func @transform_1(%arg0: i32, %arg1: i32) -> (i32, i32) {
    %c0_i32 = arith.constant 0 : i32
    %c0_i32_0 = arith.constant 0 : i32
    %c0_i32_1 = arith.constant 0 : i32
    return %c0_i32, %c0_i32_0 : i32, i32
  }
  func.func @transform_2(%arg0: i32, %arg1: i32) -> (i32, i32) {
    %c0_i32 = arith.constant 0 : i32
    %c0_i32_0 = arith.constant 0 : i32
    %c0_i32_1 = arith.constant 0 : i32
    return %c0_i32, %c0_i32_0 : i32, i32
  }
  func.func @transform_3(%arg0: i32, %arg1: i32) -> (i32, i32) {
    %c0_i32 = arith.constant 0 : i32
    %c0_i32_0 = arith.constant 0 : i32
    %c0_i32_1 = arith.constant 0 : i32
    return %c0_i32, %c0_i32_0 : i32, i32
  }
  func.func @transform_4(%arg0: i32, %arg1: i32) -> (i32, i32, i32, i32) {
    %c0_i32 = arith.constant 0 : i32
    %c0_i32_0 = arith.constant 0 : i32
    %c0_i32_1 = arith.constant 0 : i32
    return %arg0, %arg1, %c0_i32, %c0_i32_0 : i32, i32, i32, i32
  }
}

</mosaic_0001>

<llo_original>
// kernel: rebnconv_forward.1
$region0: #{rebnconv_forward.1}
  #allocation0 [shape = 'u32[]', space=smem, size = 0x4, offset = 0x4, fixed_abs, tag = 'smem constant byte address 0x4 - core index']
  #allocation1 [shape = 'u32[144,128]{1,0:T(1,128)}', space=vmem, size = 0x12000, scoped, tag = 'internal scratch']
  %s0 = inlined_call_operand.vmem [shape: bf16[2,18,18,4], index: 0, kind: input, shape index: {}]
  %s1 = inlined_call_operand.vmem [shape: bf16[36,16], index: 1, kind: input, shape index: {}]
  %s2 = inlined_call_operand.vmem [shape: f32[1,16], index: 2, kind: input, shape index: {}]
  %s3 = inlined_call_operand.vmem [shape: f32[1,16], index: 3, kind: input, shape index: {}]
  %s4 = inlined_call_operand.vmem [shape: f32[2,16,16,16], index: 4, kind: output, shape index: {}]
  %s5 = sld [smem:[#allocation0]]
  $region49: #{rebnconv_forward.1} parent=0
    _
  %s7 = ssub.s32 1, %s5
  %s8 = scalar_select 0, %s7, %s5
  loop: start=0, step=1, limit=6
  $region2: #{rebnconv_forward.1} parent=0 // loop_pre_header
    _
  $region3: #{rebnconv_forward.1} parent=0 // loop_header
    %s10 = sphi 0, %s14
    %p11 = scmp.ge.s32.totalorder %s10, 6
    %s17 = sphi 0, %s29
    %s18 = sphi 0, %s25
    %s19 = sphi 0, %s17
    %s20 = sphi 0, %s18
    %s21 = sphi 0, %s19
    %s22 = sphi 0, %s20
    %s32 = sphi 0, %s34
    %s35 = sphi 0, %s32
    %s36 = sphi 0, %s35
    %s52 = sphi 0, %s36
    %s56 = sphi 0, %s56
    %s58 = sphi 0, %s56
    %s59 = sphi 0, %s58
    %s73 = sphi 0, %s59
    %s77 = sphi 0, %s77
    %s79 = sphi 0, %s77
    %s80 = sphi 0, %s79
    %s94 = sphi 0, %s80
    %s98 = sphi 0, %s98
    %s100 = sphi 0, %s98
    %s101 = sphi 0, %s100
    %s115 = sphi 0, %s101
    %s123 = sphi 0, %s125
    %s126 = sphi 0, %s123
    %s127 = sphi 0, %s126
    %s143 = sphi 0, %s127
  $region4: #{rebnconv_forward.1} parent=0 // loop_header_branch
    %13 = sbr.rel (%p11) target = $region8
  $region5: #{rebnconv_forward.1} parent=0 // loop_body
    %s15 = ssub.s32 %s10, 1
    %s16 = ssub.s32 %s10, 2
    %s23 = sadd.s32 1, %s18
    %p24 = scmp.ge.s32.totalorder %s23, 2
    %s25 = scalar_select %p24, 0, %s23
    %s26 = sadd.s32 1, %s17
    %s27 = scalar_select %p24, %s26, %s17
    %p28 = scmp.ge.s32.totalorder %s27, 2
    %s29 = scalar_select %p28, 0, %s27
    %s30 = ssub.s32 %s17, %s29
    %p31 = scmp.eq.s32.totalorder %s30, 0
    %s33 = sadd.s32 %s32, 1
    %s34 = scalar_select %p31, %s32, %s33
    %p37 = pneg %p31
    %p38 = scmp.eq.s32.totalorder %s10, 3
    %p39 = por %p37, %p38
    %p40 = scmp.ne.s32.totalorder %s32, %s35
    %p41 = scmp.eq.s32.totalorder %s10, 0
    %p42 = por %p40, %p41
    %p43 = scmp.ne.s32.totalorder %s32, %s35
    %p44 = scmp.eq.s32.totalorder %s15, 3
    %p45 = por %p43, %p44
    %p46 = scmp.ne.s32.totalorder %s35, %s36
    %p47 = scmp.eq.s32.totalorder %s15, 0
    %p48 = por %p46, %p47
    %p49 = scmp.ne.s32.totalorder %s35, %s36
    %p50 = scmp.eq.s32.totalorder %s16, 3
    %p51 = por %p49, %p50
    %p53 = scmp.ne.s32.totalorder %s36, %s52
    %p54 = scmp.eq.s32.totalorder %s16, 0
    %p55 = por %p53, %p54
    %s57 = sadd.s32 %s56, 1
    %p60 = scmp.eq.s32.totalorder %s10, 3
    %p61 = scmp.ne.s32.totalorder %s56, %s58
    %p62 = scmp.eq.s32.totalorder %s10, 0
    %p63 = por %p61, %p62
    %p64 = scmp.ne.s32.totalorder %s56, %s58
    %p65 = scmp.eq.s32.totalorder %s15, 3
    %p66 = por %p64, %p65
    %p67 = scmp.ne.s32.totalorder %s58, %s59
    %p68 = scmp.eq.s32.totalorder %s15, 0
    %p69 = por %p67, %p68
    %p70 = scmp.ne.s32.totalorder %s58, %s59
    %p71 = scmp.eq.s32.totalorder %s16, 3
    %p72 = por %p70, %p71
    %p74 = scmp.ne.s32.totalorder %s59, %s73
    %p75 = scmp.eq.s32.totalorder %s16, 0
    %p76 = por %p74, %p75
    %s78 = sadd.s32 %s77, 1
    %p81 = scmp.eq.s32.totalorder %s10, 3
    %p82 = scmp.ne.s32.totalorder %s77, %s79
    %p83 = scmp.eq.s32.totalorder %s10, 0
    %p84 = por %p82, %p83
    %p85 = scmp.ne.s32.totalorder %s77, %s79
    %p86 = scmp.eq.s32.totalorder %s15, 3
    %p87 = por %p85, %p86
    %p88 = scmp.ne.s32.totalorder %s79, %s80
    %p89 = scmp.eq.s32.totalorder %s15, 0
    %p90 = por %p88, %p89
    %p91 = scmp.ne.s32.totalorder %s79, %s80
    %p92 = scmp.eq.s32.totalorder %s16, 3
    %p93 = por %p91, %p92
    %p95 = scmp.ne.s32.totalorder %s80, %s94
    %p96 = scmp.eq.s32.totalorder %s16, 0
    %p97 = por %p95, %p96
    %s99 = sadd.s32 %s98, 1
    %p102 = scmp.eq.s32.totalorder %s10, 3
    %p103 = scmp.ne.s32.totalorder %s98, %s100
    %p104 = scmp.eq.s32.totalorder %s10, 0
    %p105 = por %p103, %p104
    %p106 = scmp.ne.s32.totalorder %s98, %s100
    %p107 = scmp.eq.s32.totalorder %s15, 3
    %p108 = por %p106, %p107
    %p109 = scmp.ne.s32.totalorder %s100, %s101
    %p110 = scmp.eq.s32.totalorder %s15, 0
    %p111 = por %p109, %p110
    %p112 = scmp.ne.s32.totalorder %s100, %s101
    %p113 = scmp.eq.s32.totalorder %s16, 3
    %p114 = por %p112, %p113
    %p116 = scmp.ne.s32.totalorder %s101, %s115
    %p117 = scmp.eq.s32.totalorder %s16, 0
    %p118 = por %p116, %p117
    %s119 = ssub.s32 %s17, %s29
    %s120 = ssub.s32 %s18, %s25
    %s121 = sor.u32 %s119, %s120
    %p122 = scmp.eq.s32.totalorder %s121, 0
    %s124 = sadd.s32 %s123, 1
    %s125 = scalar_select %p122, %s123, %s124
    %p128 = pneg %p122
    %p129 = scmp.eq.s32.totalorder %s10, 3
    %p130 = por %p128, %p129
    %p131 = scmp.ne.s32.totalorder %s123, %s126
    %p132 = scmp.eq.s32.totalorder %s10, 0
    %p133 = por %p131, %p132
    %p134 = scmp.ne.s32.totalorder %s123, %s126
    %p135 = scmp.eq.s32.totalorder %s15, 3
    %p136 = por %p134, %p135
    %p137 = scmp.ne.s32.totalorder %s126, %s127
    %p138 = scmp.eq.s32.totalorder %s15, 0
    %p139 = por %p137, %p138
    %p140 = scmp.ne.s32.totalorder %s126, %s127
    %p141 = scmp.eq.s32.totalorder %s16, 3
    %p142 = por %p140, %p141
    %p144 = scmp.ne.s32.totalorder %s127, %s143
    %p145 = scmp.eq.s32.totalorder %s16, 0
    %p146 = por %p144, %p145
    %p147 = scmp.le.s32.totalorder 1, %s10
    %p148 = scmp.lt.s32.totalorder %s10, 5
    %p149 = pnand %p147, %p148
    %p150 = pneg %p149
    // Predicated region
    $region9: #{rebnconv_forward.1} parent=5 // pred_check
      _
    $region10: #{rebnconv_forward.1} parent=5 // pred_check_branch
      %152 = sbr.rel (%p149) target = $region12
    $region11: #{rebnconv_forward.1} parent=5 // pred_region
      %s153 = ssub.s32 %s10, 1
      // Predicated region
      $region13: #{rebnconv_forward.1} parent=11 // pred_check
        %p154 = pneg %p69
      $region14: #{rebnconv_forward.1} parent=11 // pred_check_branch
        %156 = sbr.rel (%p154) target = $region16
      $region15: #{rebnconv_forward.1} parent=11 // pred_region
        _
      $region16: #{rebnconv_forward.1} parent=11 // pred_fallthru
        _
      // Predicated region
      $region17: #{rebnconv_forward.1} parent=11 // pred_check
        %p157 = pneg %p90
      $region18: #{rebnconv_forward.1} parent=11 // pred_check_branch
        %159 = sbr.rel (%p157) target = $region20
      $region19: #{rebnconv_forward.1} parent=11 // pred_region
        _
      $region20: #{rebnconv_forward.1} parent=11 // pred_fallthru
        _
      // Predicated region
      $region21: #{rebnconv_forward.1} parent=11 // pred_check
        %p160 = pneg %p111
      $region22: #{rebnconv_forward.1} parent=11 // pred_check_branch
        %162 = sbr.rel (%p160) target = $region24
      $region23: #{rebnconv_forward.1} parent=11 // pred_region
        _
      $region24: #{rebnconv_forward.1} parent=11 // pred_fallthru
        _
    $region12: #{rebnconv_forward.1} parent=5 // pred_fallthru
      _
    %p163 = scmp.lt.s32.totalorder %s10, 4
    // Predicated region
    $region25: #{rebnconv_forward.1} parent=5 // pred_check
      %p164 = pneg %p163
    $region26: #{rebnconv_forward.1} parent=5 // pred_check_branch
      %166 = sbr.rel (%p164) target = $region28
    $region27: #{rebnconv_forward.1} parent=5 // pred_region
      // Predicated region
      $region29: #{rebnconv_forward.1} parent=27 // pred_check
        %p167 = pneg %p42
      $region30: #{rebnconv_forward.1} parent=27 // pred_check_branch
        %169 = sbr.rel (%p167) target = $region32
      $region31: #{rebnconv_forward.1} parent=27 // pred_region
        %p170 = scmp.lt.s32.totalorder %s17, 1
        %s171 = scalar_select %p170, %s17, 1
        %s172 = smul.addr %s171, 54
        %s173 = smul.addr %s172, 4
        %s174 = scalar_lea.vmem %s0, %s173
      $region32: #{rebnconv_forward.1} parent=27 // pred_fallthru
        _
    $region28: #{rebnconv_forward.1} parent=5 // pred_fallthru
      _
    %p175 = scmp.le.s32.totalorder 1, %s10
    %p176 = scmp.lt.s32.totalorder %s10, 5
    %p177 = pnand %p175, %p176
    %p178 = pneg %p177
    // Predicated region
    $region33: #{rebnconv_forward.1} parent=5 // pred_check
      _
    $region34: #{rebnconv_forward.1} parent=5 // pred_check_branch
      %180 = sbr.rel (%p177) target = $region36
    $region35: #{rebnconv_forward.1} parent=5 // pred_region
      %s181 = ssub.s32 %s10, 1
      %p182 = scmp.lt.s32.totalorder %s19, 1
      %s183 = scalar_select %p182, %s19, 1
      %s184 = smul.addr %s183, 54
      %s185 = smul.addr %s184, 4
      %s186 = scalar_lea.vmem %s0, %s185
      %p187 = pneg %p48
      %p188 = pneg %p45
      %p189 = pneg %p69
      %p190 = pneg %p66
      %p191 = pneg %p90
      %p192 = pneg %p87
      %p193 = pneg %p111
      %p194 = pneg %p108
      %p195 = pneg %p139
      %p196 = pneg %p136
      %s197 = smul.u32 8, %s20
      %p198 = scmp.lt.s32.totalorder %s19, 1
      %s199 = scalar_select %p198, %s19, 1
      %p200 = scmp.lt.s32.totalorder %s197, 15
      %s201 = scalar_select %p200, %s197, 15
      %s202 = smul.addr %s201, 2
      %s203 = smul.addr %s199, 32
      %s204 = sadd.s32 %s202, %s203
      %s205 = smul.addr %s204, 8
      %s206 = scalar_lea.vmem %s4, %s205
      %p207 = scmp.lt.s32.totalorder %s19, 1
      %s208 = scalar_select %p207, %s19, 1
      %s209 = smul.addr %s208, 54
      %s210 = smul.addr %s209, 4
      %s211 = scalar_lea.vmem %s0, %s210
      %s212 = smul.u32 8, %s20
      %p213 = scmp.lt.s32.totalorder %s19, 1
      %s214 = scalar_select %p213, %s19, 1
      %p215 = scmp.lt.s32.totalorder %s212, 15
      %s216 = scalar_select %p215, %s212, 15
      %s217 = smul.addr %s216, 2
      %s218 = smul.addr %s214, 32
      %s219 = sadd.s32 %s217, %s218
      %s220 = smul.addr %s219, 8
      %s221 = scalar_lea.vmem %s4, %s220
      %s222 = smul.u32 8, %s20
      %s224 = smul.u32 %s20, 8
      %s225 = smul.u32 %s224, 3
      %s226 = smul.addr %s225, 4
      %s227 = scalar_lea.vmem %s211, %s226
      %v228 = vld [vmem:[%s227] sm:$0xf]
      %v229 = vld [vmem:[%s227 + $0x4] sm:$0xf]
      %v230 = vld [vmem:[%s227 + $0x8] sm:$0x1]
      %v231 = vld [vmem:[%s227 + $0xc] sm:$0xf]
      %v232 = vld [vmem:[%s227 + $0x10] sm:$0xf]
      %v233 = vld [vmem:[%s227 + $0x14] sm:$0x1]
      %v234 = vld [vmem:[%s227 + $0x18] sm:$0xf]
      %v235 = vld [vmem:[%s227 + $0x1c] sm:$0xf]
      %v236 = vld [vmem:[%s227 + $0x20] sm:$0x1]
      %v237 = vld [vmem:[%s227 + $0x24] sm:$0xf]
      %v238 = vld [vmem:[%s227 + $0x28] sm:$0xf]
      %v239 = vld [vmem:[%s227 + $0x2c] sm:$0x1]
      %v240 = vld [vmem:[%s227 + $0x30] sm:$0xf]
      %v241 = vld [vmem:[%s227 + $0x34] sm:$0xf]
      %v242 = vld [vmem:[%s227 + $0x38] sm:$0x1]
      %v243 = vld [vmem:[%s227 + $0x3c] sm:$0xf]
      %v244 = vld [vmem:[%s227 + $0x40] sm:$0xf]
      %v245 = vld [vmem:[%s227 + $0x44] sm:$0x1]
      %v246 = vld [vmem:[%s227 + $0x48] sm:$0xf]
      %v247 = vld [vmem:[%s227 + $0x4c] sm:$0xf]
      %v248 = vld [vmem:[%s227 + $0x50] sm:$0x1]
      %v249 = vld [vmem:[%s227 + $0x54] sm:$0xf]
      %v250 = vld [vmem:[%s227 + $0x58] sm:$0xf]
      %v251 = vld [vmem:[%s227 + $0x5c] sm:$0x1]
      %v252 = vld [vmem:[%s227 + $0x60] sm:$0xf]
      %v253 = vld [vmem:[%s227 + $0x64] sm:$0xf]
      %v254 = vld [vmem:[%s227 + $0x68] sm:$0x1]
      %v255 = vld [vmem:[%s227 + $0x6c] sm:$0xf]
      %v256 = vld [vmem:[%s227 + $0x70] sm:$0xf]
      %v257 = vld [vmem:[%s227 + $0x74] sm:$0x1]
      %v274 = vunpack.c.l.b16 %v228
      %v275 = vunpack.c.l.b16 %v229
      %v276 = vunpack.c.l.b16 %v231
      %v277 = vunpack.c.l.b16 %v232
      %v278 = vunpack.c.l.b16 %v234
      %v279 = vunpack.c.l.b16 %v235
      %v280 = vunpack.c.l.b16 %v237
      %v281 = vunpack.c.l.b16 %v238
      %v282 = vunpack.c.l.b16 %v240
      %v283 = vunpack.c.l.b16 %v241
      %v284 = vunpack.c.l.b16 %v243
      %v285 = vunpack.c.l.b16 %v244
      %v286 = vunpack.c.l.b16 %v246
      %v287 = vunpack.c.l.b16 %v247
      %v288 = vunpack.c.l.b16 %v249
      %v289 = vunpack.c.l.b16 %v250
      %v290 = vpack.c.b16 %v275, %v274
      %v291 = vpack.c.b16 %v277, %v276
      %v292 = vpack.c.b16 %v279, %v278
      %v293 = vpack.c.b16 %v281, %v280
      %v294 = vpack.c.b16 %v283, %v282
      %v295 = vpack.c.b16 %v285, %v284
      %v296 = vpack.c.b16 %v287, %v286
      %v297 = vpack.c.b16 %v289, %v288
      %v306 = vunpack.c.l.b16 %v230
      %v307 = vunpack.c.l.b16 %v233
      %v308 = vunpack.c.l.b16 %v236
      %v309 = vunpack.c.l.b16 %v239
      %v310 = vunpack.c.l.b16 %v242
      %v311 = vunpack.c.l.b16 %v245
      %v312 = vunpack.c.l.b16 %v248
      %v313 = vunpack.c.l.b16 %v251
      %v314 = vpack.c.b16 %v306, %v306
      %v315 = vpack.c.b16 %v307, %v307
      %v316 = vpack.c.b16 %v308, %v308
      %v317 = vpack.c.b16 %v309, %v309
      %v318 = vpack.c.b16 %v310, %v310
      %v319 = vpack.c.b16 %v311, %v311
      %v320 = vpack.c.b16 %v312, %v312
      %v321 = vpack.c.b16 %v313, %v313
      %vm322 = vsmask.f32 7424
      %v324 = vshrl.u32 %v290, 16
      %v326 = vshll.u32 %v290, 16
      %v328 = vrot.slane %v326, 1
      %v329 = vor.u32 %v324, %v328
      %v331 = vshll.u32 %v314, 16
      %v333 = vrot.slane %v331, 1
      %v334 = vsel %vm322, %v329, %v333
      %v336 = vshrl.u32 %v291, 16
      %v338 = vshll.u32 %v291, 16
      %v340 = vrot.slane %v338, 1
      %v341 = vor.u32 %v336, %v340
      %v343 = vshll.u32 %v315, 16
      %v345 = vrot.slane %v343, 1
      %v346 = vsel %vm322, %v341, %v345
      %v348 = vshrl.u32 %v292, 16
      %v350 = vshll.u32 %v292, 16
      %v352 = vrot.slane %v350, 1
      %v353 = vor.u32 %v348, %v352
      %v355 = vshll.u32 %v316, 16
      %v357 = vrot.slane %v355, 1
      %v358 = vsel %vm322, %v353, %v357
      %v360 = vshrl.u32 %v293, 16
      %v362 = vshll.u32 %v293, 16
      %v364 = vrot.slane %v362, 1
      %v365 = vor.u32 %v360, %v364
      %v367 = vshll.u32 %v317, 16
      %v369 = vrot.slane %v367, 1
      %v370 = vsel %vm322, %v365, %v369
      %v372 = vshrl.u32 %v294, 16
      %v374 = vshll.u32 %v294, 16
      %v376 = vrot.slane %v374, 1
      %v377 = vor.u32 %v372, %v376
      %v379 = vshll.u32 %v318, 16
      %v381 = vrot.slane %v379, 1
      %v382 = vsel %vm322, %v377, %v381
      %v384 = vshrl.u32 %v295, 16
      %v386 = vshll.u32 %v295, 16
      %v388 = vrot.slane %v386, 1
      %v389 = vor.u32 %v384, %v388
      %v391 = vshll.u32 %v319, 16
      %v393 = vrot.slane %v391, 1
      %v394 = vsel %vm322, %v389, %v393
      %v396 = vshrl.u32 %v296, 16
      %v398 = vshll.u32 %v296, 16
      %v400 = vrot.slane %v398, 1
      %v401 = vor.u32 %v396, %v400
      %v403 = vshll.u32 %v320, 16
      %v405 = vrot.slane %v403, 1
      %v406 = vsel %vm322, %v401, %v405
      %v408 = vshrl.u32 %v297, 16
      %v410 = vshll.u32 %v297, 16
      %v412 = vrot.slane %v410, 1
      %v413 = vor.u32 %v408, %v412
      %v415 = vshll.u32 %v321, 16
      %v417 = vrot.slane %v415, 1
      %v418 = vsel %vm322, %v413, %v417
      %419 = vrot.lane.b32.xlu0 %v334, 4
      %v420 = vpop.permute.xlu0 %419
      %421 = vrot.lane.b32.xlu0 %v346, 4
      %v422 = vpop.permute.xlu0 %421
      %423 = vrot.lane.b32.xlu0 %v358, 4
      %v424 = vpop.permute.xlu0 %423
      %425 = vrot.lane.b32.xlu0 %v370, 4
      %v426 = vpop.permute.xlu0 %425
      %427 = vrot.lane.b32.xlu0 %v382, 4
      %v428 = vpop.permute.xlu0 %427
      %429 = vrot.lane.b32.xlu0 %v394, 4
      %v430 = vpop.permute.xlu0 %429
      %431 = vrot.lane.b32.xlu0 %v406, 4
      %v432 = vpop.permute.xlu0 %431
      %433 = vrot.lane.b32.xlu0 %v418, 4
      %v434 = vpop.permute.xlu0 %433
      %vm435 = vcmask 1046528
      %v436 = vrot.slane %v290, 1
      %v437 = vrot.slane %v314, 1
      %v438 = vsel %vm435, %v436, %v437
      %v439 = vrot.slane %v291, 1
      %v440 = vrot.slane %v315, 1
      %v441 = vsel %vm435, %v439, %v440
      %v442 = vrot.slane %v292, 1
      %v443 = vrot.slane %v316, 1
      %v444 = vsel %vm435, %v442, %v443
      %v445 = vrot.slane %v293, 1
      %v446 = vrot.slane %v317, 1
      %v447 = vsel %vm435, %v445, %v446
      %v448 = vrot.slane %v294, 1
      %v449 = vrot.slane %v318, 1
      %v450 = vsel %vm435, %v448, %v449
      %v451 = vrot.slane %v295, 1
      %v452 = vrot.slane %v319, 1
      %v453 = vsel %vm435, %v451, %v452
      %v454 = vrot.slane %v296, 1
      %v455 = vrot.slane %v320, 1
      %v456 = vsel %vm435, %v454, %v455
      %v457 = vrot.slane %v297, 1
      %v458 = vrot.slane %v321, 1
      %v459 = vsel %vm435, %v457, %v458
      %460 = vrot.lane.b32.xlu0 %v438, 8
      %v461 = vpop.permute.xlu0 %460
      %462 = vrot.lane.b32.xlu0 %v441, 8
      %v463 = vpop.permute.xlu0 %462
      %464 = vrot.lane.b32.xlu0 %v444, 8
      %v465 = vpop.permute.xlu0 %464
      %466 = vrot.lane.b32.xlu0 %v447, 8
      %v467 = vpop.permute.xlu0 %466
      %468 = vrot.lane.b32.xlu0 %v450, 8
      %v469 = vpop.permute.xlu0 %468
      %470 = vrot.lane.b32.xlu0 %v453, 8
      %v471 = vpop.permute.xlu0 %470
      %472 = vrot.lane.b32.xlu0 %v456, 8
      %v473 = vpop.permute.xlu0 %472
      %474 = vrot.lane.b32.xlu0 %v459, 8
      %v475 = vpop.permute.xlu0 %474
      %v478 = vunpack.c.l.b16 %v252
      %v479 = vunpack.c.l.b16 %v253
      %v480 = vpack.c.b16 %v479, %v478
      %481 = vrot.lane.b32.xlu0 %v291, 12
      %v482 = vpop.permute.xlu0 %481
      %483 = vrot.lane.b32.xlu0 %v292, 12
      %v484 = vpop.permute.xlu0 %483
      %485 = vrot.lane.b32.xlu0 %v293, 12
      %v486 = vpop.permute.xlu0 %485
      %487 = vrot.lane.b32.xlu0 %v294, 12
      %v488 = vpop.permute.xlu0 %487
      %489 = vrot.lane.b32.xlu0 %v295, 12
      %v490 = vpop.permute.xlu0 %489
      %491 = vrot.lane.b32.xlu0 %v296, 12
      %v492 = vpop.permute.xlu0 %491
      %493 = vrot.lane.b32.xlu0 %v297, 12
      %v494 = vpop.permute.xlu0 %493
      %495 = vrot.lane.b32.xlu0 %v480, 12
      %v496 = vpop.permute.xlu0 %495
      %v498 = vunpack.c.l.b16 %v254
      %v499 = vpack.c.b16 %v498, %v498
      %v501 = vshrl.u32 %v480, 16
      %v503 = vshll.u32 %v480, 16
      %v505 = vrot.slane %v503, 1
      %v506 = vor.u32 %v501, %v505
      %v508 = vshll.u32 %v499, 16
      %v510 = vrot.slane %v508, 1
      %v511 = vsel %vm322, %v506, %v510
      %512 = vrot.lane.b32.xlu0 %v346, 16
      %v513 = vpop.permute.xlu0 %512
      %514 = vrot.lane.b32.xlu0 %v358, 16
      %v515 = vpop.permute.xlu0 %514
      %516 = vrot.lane.b32.xlu0 %v370, 16
      %v517 = vpop.permute.xlu0 %516
      %518 = vrot.lane.b32.xlu0 %v382, 16
      %v519 = vpop.permute.xlu0 %518
      %520 = vrot.lane.b32.xlu0 %v394, 16
      %v521 = vpop.permute.xlu0 %520
      %522 = vrot.lane.b32.xlu0 %v406, 16
      %v523 = vpop.permute.xlu0 %522
      %524 = vrot.lane.b32.xlu0 %v418, 16
      %v525 = vpop.permute.xlu0 %524
      %526 = vrot.lane.b32.xlu0 %v511, 16
      %v527 = vpop.permute.xlu0 %526
      %v528 = vrot.slane %v480, 1
      %v529 = vrot.slane %v499, 1
      %v530 = vsel %vm435, %v528, %v529
      %531 = vrot.lane.b32.xlu0 %v441, 20
      %v532 = vpop.permute.xlu0 %531
      %533 = vrot.lane.b32.xlu0 %v444, 20
      %v534 = vpop.permute.xlu0 %533
      %535 = vrot.lane.b32.xlu0 %v447, 20
      %v536 = vpop.permute.xlu0 %535
      %537 = vrot.lane.b32.xlu0 %v450, 20
      %v538 = vpop.permute.xlu0 %537
      %539 = vrot.lane.b32.xlu0 %v453, 20
      %v540 = vpop.permute.xlu0 %539
      %541 = vrot.lane.b32.xlu0 %v456, 20
      %v542 = vpop.permute.xlu0 %541
      %543 = vrot.lane.b32.xlu0 %v459, 20
      %v544 = vpop.permute.xlu0 %543
      %545 = vrot.lane.b32.xlu0 %v530, 20
      %v546 = vpop.permute.xlu0 %545
      %v549 = vunpack.c.l.b16 %v255
      %v550 = vunpack.c.l.b16 %v256
      %v551 = vpack.c.b16 %v550, %v549
      %552 = vrot.lane.b32.xlu0 %v292, 24
      %v553 = vpop.permute.xlu0 %552
      %554 = vrot.lane.b32.xlu0 %v293, 24
      %v555 = vpop.permute.xlu0 %554
      %556 = vrot.lane.b32.xlu0 %v294, 24
      %v557 = vpop.permute.xlu0 %556
      %558 = vrot.lane.b32.xlu0 %v295, 24
      %v559 = vpop.permute.xlu0 %558
      %560 = vrot.lane.b32.xlu0 %v296, 24
      %v561 = vpop.permute.xlu0 %560
      %562 = vrot.lane.b32.xlu0 %v297, 24
      %v563 = vpop.permute.xlu0 %562
      %564 = vrot.lane.b32.xlu0 %v480, 24
      %v565 = vpop.permute.xlu0 %564
      %566 = vrot.lane.b32.xlu0 %v551, 24
      %v567 = vpop.permute.xlu0 %566
      %v569 = vunpack.c.l.b16 %v257
      %v570 = vpack.c.b16 %v569, %v569
      %v572 = vshrl.u32 %v551, 16
      %v574 = vshll.u32 %v551, 16
      %v576 = vrot.slane %v574, 1
      %v577 = vor.u32 %v572, %v576
      %v579 = vshll.u32 %v570, 16
      %v581 = vrot.slane %v579, 1
      %v582 = vsel %vm322, %v577, %v581
      %583 = vrot.lane.b32.xlu0 %v358, 28
      %v584 = vpop.permute.xlu0 %583
      %585 = vrot.lane.b32.xlu0 %v370, 28
      %v586 = vpop.permute.xlu0 %585
      %587 = vrot.lane.b32.xlu0 %v382, 28
      %v588 = vpop.permute.xlu0 %587
      %589 = vrot.lane.b32.xlu0 %v394, 28
      %v590 = vpop.permute.xlu0 %589
      %591 = vrot.lane.b32.xlu0 %v406, 28
      %v592 = vpop.permute.xlu0 %591
      %593 = vrot.lane.b32.xlu0 %v418, 28
      %v594 = vpop.permute.xlu0 %593
      %595 = vrot.lane.b32.xlu0 %v511, 28
      %v596 = vpop.permute.xlu0 %595
      %597 = vrot.lane.b32.xlu0 %v582, 28
      %v598 = vpop.permute.xlu0 %597
      %v599 = vrot.slane %v551, 1
      %v600 = vrot.slane %v570, 1
      %v601 = vsel %vm435, %v599, %v600
      %602 = vrot.lane.b32.xlu0 %v444, 32
      %v603 = vpop.permute.xlu0 %602
      %604 = vrot.lane.b32.xlu0 %v447, 32
      %v605 = vpop.permute.xlu0 %604
      %606 = vrot.lane.b32.xlu0 %v450, 32
      %v607 = vpop.permute.xlu0 %606
      %608 = vrot.lane.b32.xlu0 %v453, 32
      %v609 = vpop.permute.xlu0 %608
      %610 = vrot.lane.b32.xlu0 %v456, 32
      %v611 = vpop.permute.xlu0 %610
      %612 = vrot.lane.b32.xlu0 %v459, 32
      %v613 = vpop.permute.xlu0 %612
      %614 = vrot.lane.b32.xlu0 %v530, 32
      %v615 = vpop.permute.xlu0 %614
      %616 = vrot.lane.b32.xlu0 %v601, 32
      %v617 = vpop.permute.xlu0 %616
      %vm618 = vcmask 31744
      %v620 = vsel %vm618, %v290, %v420
      %v622 = vsel %vm618, %v291, %v422
      %v624 = vsel %vm618, %v292, %v424
      %v626 = vsel %vm618, %v293, %v426
      %v628 = vsel %vm618, %v294, %v428
      %v630 = vsel %vm618, %v295, %v430
      %v632 = vsel %vm618, %v296, %v432
      %v634 = vsel %vm618, %v297, %v434
      %vm635 = vcmask 64512
      %v637 = vsel %vm635, %v620, %v461
      %v639 = vsel %vm635, %v622, %v463
      %v641 = vsel %vm635, %v624, %v465
      %v643 = vsel %vm635, %v626, %v467
      %v645 = vsel %vm635, %v628, %v469
      %v647 = vsel %vm635, %v630, %v471
      %v649 = vsel %vm635, %v632, %v473
      %v651 = vsel %vm635, %v634, %v475
      %vm652 = vcmask 97280
      %v654 = vsel %vm652, %v637, %v482
      %v656 = vsel %vm652, %v639, %v484
      %v658 = vsel %vm652, %v641, %v486
      %v660 = vsel %vm652, %v643, %v488
      %v662 = vsel %vm652, %v645, %v490
      %v664 = vsel %vm652, %v647, %v492
      %v666 = vsel %vm652, %v649, %v494
      %v668 = vsel %vm652, %v651, %v496
      %vm669 = vcmask 130048
      %v671 = vsel %vm669, %v654, %v513
      %v673 = vsel %vm669, %v656, %v515
      %v675 = vsel %vm669, %v658, %v517
      %v677 = vsel %vm669, %v660, %v519
      %v679 = vsel %vm669, %v662, %v521
      %v681 = vsel %vm669, %v664, %v523
      %v683 = vsel %vm669, %v666, %v525
      %v685 = vsel %vm669, %v668, %v527
      %vm686 = vcmask 162816
      %v688 = vsel %vm686, %v671, %v532
      %v690 = vsel %vm686, %v673, %v534
      %v692 = vsel %vm686, %v675, %v536
      %v694 = vsel %vm686, %v677, %v538
      %v696 = vsel %vm686, %v679, %v540
      %v698 = vsel %vm686, %v681, %v542
      %v700 = vsel %vm686, %v683, %v544
      %v702 = vsel %vm686, %v685, %v546
      %vm703 = vcmask 195584
      %v705 = vsel %vm703, %v688, %v553
      %v707 = vsel %vm703, %v690, %v555
      %v709 = vsel %vm703, %v692, %v557
      %v711 = vsel %vm703, %v694, %v559
      %v713 = vsel %vm703, %v696, %v561
      %v715 = vsel %vm703, %v698, %v563
      %v717 = vsel %vm703, %v700, %v565
      %v719 = vsel %vm703, %v702, %v567
      %vm720 = vcmask 228352
      %v722 = vsel %vm720, %v705, %v584
      %v724 = vsel %vm720, %v707, %v586
      %v726 = vsel %vm720, %v709, %v588
      %v728 = vsel %vm720, %v711, %v590
      %v730 = vsel %vm720, %v713, %v592
      %v732 = vsel %vm720, %v715, %v594
      %v734 = vsel %vm720, %v717, %v596
      %v736 = vsel %vm720, %v719, %v598
      %vm737 = vcmask 261120
      %v739 = vsel %vm737, %v722, %v603
      %v741 = vsel %vm737, %v724, %v605
      %v743 = vsel %vm737, %v726, %v607
      %v745 = vsel %vm737, %v728, %v609
      %v747 = vsel %vm737, %v730, %v611
      %v749 = vsel %vm737, %v732, %v613
      %v751 = vsel %vm737, %v734, %v615
      %v753 = vsel %vm737, %v736, %v617
      %v754 = vld [vmem:[%s1] sm:$0xf]
      %v755 = vld [vmem:[%s1 + $0x4] sm:$0xf]
      %v756 = vld [vmem:[%s1 + $0x8] sm:$0xf]
      %v757 = vld [vmem:[%s1 + $0xc] sm:$0xf]
      %v758 = vld [vmem:[%s1 + $0x10] sm:$0x3]
      %v764 = vunpack.c.l.b16 %v754
      %v765 = vunpack.c.l.b16 %v755
      %v766 = vunpack.c.l.b16 %v756
      %v767 = vunpack.c.l.b16 %v757
      %v768 = vunpack.c.l.b16 %v758
      %v769 = vpack.c.b16 %v765, %v764
      %v770 = vpack.c.b16 %v767, %v766
      %v771 = vpack.c.b16 %v768, %v768
      %vm774 = vcmask 293888
      %v775 = vsel %vm774, %v739, 0
      %v777 = vsel %vm774, %v741, 0
      %v779 = vsel %vm774, %v743, 0
      %v781 = vsel %vm774, %v745, 0
      %v783 = vsel %vm774, %v747, 0
      %v785 = vsel %vm774, %v749, 0
      %v787 = vsel %vm774, %v751, 0
      %v789 = vsel %vm774, %v753, 0
      %vm791 = vcmask 1041408
      %v793 = vsel %vm791, %v771, 0
      %795 = vmatprep.subr.bf16.mxu0 0
      %796 = vmatpush1.bf16.msra.mxu0 %v769
      %797 = vmatprep.subr.bf16.mxu0 0
      %798 = vmatpush1.bf16.msra.mxu0 %v770
      %799 = vmatprep.subr.bf16.mxu0 0
      %800 = vmatpush1.bf16.msra.mxu0 %v793
      %801 = vmatprep.subr.bf16.mxu0 0
      %802 = vmatpush1.bf16.msra.mxu0 0
      %803 = vmatprep.subr.bf16.mxu0 0
      %804 = vmatpush1.bf16.msra.mxu0 0
      %805 = vmatprep.subr.bf16.mxu0 0
      %806 = vmatpush1.bf16.msra.mxu0 0
      %807 = vmatprep.subr.bf16.mxu0 0
      %808 = vmatpush1.bf16.msra.mxu0 0
      %809 = vmatprep.subr.bf16.mxu0 0
      %810 = vmatpush1.bf16.msra.mxu0 0
      %811 = vmatprep.subr.bf16.mxu0 0
      %812 = vmatpush1.bf16.msra.mxu0 0
      %813 = vmatprep.subr.bf16.mxu0 0
      %814 = vmatpush1.bf16.msra.mxu0 0
      %815 = vmatprep.subr.bf16.mxu0 0
      %816 = vmatpush1.bf16.msra.mxu0 0
      %817 = vmatprep.subr.bf16.mxu0 0
      %818 = vmatpush1.bf16.msra.mxu0 0
      %819 = vmatprep.subr.bf16.mxu0 0
      %820 = vmatpush1.bf16.msra.mxu0 0
      %821 = vmatprep.subr.bf16.mxu0 0
      %822 = vmatpush1.bf16.msra.mxu0 0
      %823 = vmatprep.subr.bf16.mxu0 0
      %824 = vmatpush1.bf16.msra.mxu0 0
      %825 = vmatprep.subr.bf16.mxu0 0
      %826 = vmatpush1.bf16.msra.mxu0 0
      %827 = vmatprep.mubr.bf16.mxu0 0
      %828 = vmatmul.mubr.bf16.gmra.mrb[0].mxu0 %v775
      %v829 = vpop.f32.mrb[0].mxu0
      %v830 = vadd.f32 0.0, %v829
      %v831 = vpop.f32.mrb[0].mxu0
      %v832 = vpop.f32.mrb[0].mxu0
      %v833 = vadd.f32 0.0, %v832
      %v834 = vpop.f32.mrb[0].mxu0
      %835 = vmatprep.mubr.bf16.mxu0 0
      %836 = vmatmul.mubr.bf16.gmra.mrb[0].mxu0 %v777
      %v837 = vpop.f32.mrb[0].mxu0
      %v838 = vadd.f32 0.0, %v837
      %v839 = vpop.f32.mrb[0].mxu0
      %v840 = vpop.f32.mrb[0].mxu0
      %v841 = vadd.f32 0.0, %v840
      %v842 = vpop.f32.mrb[0].mxu0
      %843 = vmatprep.mubr.bf16.mxu0 0
      %844 = vmatmul.mubr.bf16.gmra.mrb[0].mxu0 %v779
      %v845 = vpop.f32.mrb[0].mxu0
      %v846 = vadd.f32 0.0, %v845
      %v847 = vpop.f32.mrb[0].mxu0
      %v848 = vpop.f32.mrb[0].mxu0
      %v849 = vadd.f32 0.0, %v848
      %v850 = vpop.f32.mrb[0].mxu0
      %851 = vmatprep.mubr.bf16.mxu0 0
      %852 = vmatmul.mubr.bf16.gmra.mrb[0].mxu0 %v781
      %v853 = vpop.f32.mrb[0].mxu0
      %v854 = vadd.f32 0.0, %v853
      %v855 = vpop.f32.mrb[0].mxu0
      %v856 = vpop.f32.mrb[0].mxu0
      %v857 = vadd.f32 0.0, %v856
      %v858 = vpop.f32.mrb[0].mxu0
      %859 = vmatprep.mubr.bf16.mxu0 0
      %860 = vmatmul.mubr.bf16.gmra.mrb[0].mxu0 %v783
      %v861 = vpop.f32.mrb[0].mxu0
      %v862 = vadd.f32 0.0, %v861
      %v863 = vpop.f32.mrb[0].mxu0
      %v864 = vpop.f32.mrb[0].mxu0
      %v865 = vadd.f32 0.0, %v864
      %v866 = vpop.f32.mrb[0].mxu0
      %867 = vmatprep.mubr.bf16.mxu0 0
      %868 = vmatmul.mubr.bf16.gmra.mrb[0].mxu0 %v785
      %v869 = vpop.f32.mrb[0].mxu0
      %v870 = vadd.f32 0.0, %v869
      %v871 = vpop.f32.mrb[0].mxu0
      %v872 = vpop.f32.mrb[0].mxu0
      %v873 = vadd.f32 0.0, %v872
      %v874 = vpop.f32.mrb[0].mxu0
      %875 = vmatprep.mubr.bf16.mxu0 0
      %876 = vmatmul.mubr.bf16.gmra.mrb[0].mxu0 %v787
      %v877 = vpop.f32.mrb[0].mxu0
      %v878 = vadd.f32 0.0, %v877
      %v879 = vpop.f32.mrb[0].mxu0
      %v880 = vpop.f32.mrb[0].mxu0
      %v881 = vadd.f32 0.0, %v880
      %v882 = vpop.f32.mrb[0].mxu0
      %883 = vmatprep.mubr.bf16.mxu0 0
      %884 = vmatmul.mubr.bf16.gmra.mrb[0].mxu0 %v789
      %v885 = vpop.f32.mrb[0].mxu0
      %v886 = vadd.f32 0.0, %v885
      %v887 = vpop.f32.mrb[0].mxu0
      %v888 = vpop.f32.mrb[0].mxu0
      %v889 = vadd.f32 0.0, %v888
      %v890 = vpop.f32.mrb[0].mxu0
      %891 = vdwg.mxu0
      %v892 = vld [vmem:[%s2] sm:$0x1]
      %v894 = vlaneseq
      %v895 = vshrl.u32 %v894, 7
      %v896 = vsub.s32 0, %v895
      %v897 = vrot.slane %v892, %v896
      %v899 = vmul.f32 %v830, %v897
      %v900 = vmul.f32 %v833, %v897
      %v901 = vmul.f32 %v838, %v897
      %v902 = vmul.f32 %v841, %v897
      %v903 = vmul.f32 %v846, %v897
      %v904 = vmul.f32 %v849, %v897
      %v905 = vmul.f32 %v854, %v897
      %v906 = vmul.f32 %v857, %v897
      %v907 = vmul.f32 %v862, %v897
      %v908 = vmul.f32 %v865, %v897
      %v909 = vmul.f32 %v870, %v897
      %v910 = vmul.f32 %v873, %v897
      %v911 = vmul.f32 %v878, %v897
      %v912 = vmul.f32 %v881, %v897
      %v913 = vmul.f32 %v886, %v897
      %v914 = vmul.f32 %v889, %v897
      %v915 = vld [vmem:[%s3] sm:$0x1]
      %v917 = vlaneseq
      %v918 = vshrl.u32 %v917, 7
      %v919 = vsub.s32 0, %v918
      %v920 = vrot.slane %v915, %v919
      %v922 = vadd.f32 %v899, %v920
      %v923 = vadd.f32 %v900, %v920
      %v924 = vadd.f32 %v901, %v920
      %v925 = vadd.f32 %v902, %v920
      %v926 = vadd.f32 %v903, %v920
      %v927 = vadd.f32 %v904, %v920
      %v928 = vadd.f32 %v905, %v920
      %v929 = vadd.f32 %v906, %v920
      %v930 = vadd.f32 %v907, %v920
      %v931 = vadd.f32 %v908, %v920
      %v932 = vadd.f32 %v909, %v920
      %v933 = vadd.f32 %v910, %v920
      %v934 = vadd.f32 %v911, %v920
      %v935 = vadd.f32 %v912, %v920
      %v936 = vadd.f32 %v913, %v920
      %v937 = vadd.f32 %v914, %v920
      %v938 = vmax.f32 %v922, 0.0
      %v939 = vmax.f32 %v923, 0.0
      %v940 = vmax.f32 %v924, 0.0
      %v941 = vmax.f32 %v925, 0.0
      %v942 = vmax.f32 %v926, 0.0
      %v943 = vmax.f32 %v927, 0.0
      %v944 = vmax.f32 %v928, 0.0
      %v945 = vmax.f32 %v929, 0.0
      %v946 = vmax.f32 %v930, 0.0
      %v947 = vmax.f32 %v931, 0.0
      %v948 = vmax.f32 %v932, 0.0
      %v949 = vmax.f32 %v933, 0.0
      %v950 = vmax.f32 %v934, 0.0
      %v951 = vmax.f32 %v935, 0.0
      %v952 = vmax.f32 %v936, 0.0
      %v953 = vmax.f32 %v937, 0.0
      %954 = vst.msk [vmem:[%s221] sm:$0xff] %vm669, %v938
      %955 = vst.msk [vmem:[%s221 + $0x8] sm:$0xff] %vm669, %v939
      %956 = vst.msk [vmem:[%s221 + $0x10] sm:$0xff] %vm669, %v940
      %957 = vst.msk [vmem:[%s221 + $0x18] sm:$0xff] %vm669, %v941
      %958 = vst.msk [vmem:[%s221 + $0x20] sm:$0xff] %vm669, %v942
      %959 = vst.msk [vmem:[%s221 + $0x28] sm:$0xff] %vm669, %v943
      %960 = vst.msk [vmem:[%s221 + $0x30] sm:$0xff] %vm669, %v944
      %961 = vst.msk [vmem:[%s221 + $0x38] sm:$0xff] %vm669, %v945
      %962 = vst.msk [vmem:[%s221 + $0x40] sm:$0xff] %vm669, %v946
      %963 = vst.msk [vmem:[%s221 + $0x48] sm:$0xff] %vm669, %v947
      %964 = vst.msk [vmem:[%s221 + $0x50] sm:$0xff] %vm669, %v948
      %965 = vst.msk [vmem:[%s221 + $0x58] sm:$0xff] %vm669, %v949
      %966 = vst.msk [vmem:[%s221 + $0x60] sm:$0xff] %vm669, %v950
      %967 = vst.msk [vmem:[%s221 + $0x68] sm:$0xff] %vm669, %v951
      %968 = vst.msk [vmem:[%s221 + $0x70] sm:$0xff] %vm669, %v952
      %969 = vst.msk [vmem:[%s221 + $0x78] sm:$0xff] %vm669, %v953
      %s970 = smul.u32 8, %s20
      %p971 = scmp.lt.s32.totalorder %s19, 1
      %s972 = scalar_select %p971, %s19, 1
      %p973 = scmp.lt.s32.totalorder %s970, 15
      %s974 = scalar_select %p973, %s970, 15
      %s975 = smul.addr %s974, 2
      %s976 = smul.addr %s972, 32
      %s977 = sadd.s32 %s975, %s976
      %s978 = smul.addr %s977, 8
      %s979 = scalar_lea.vmem %s4, %s978
      // Predicated region
      $region37: #{rebnconv_forward.1} parent=35 // pred_check
        %p980 = pneg %p136
      $region38: #{rebnconv_forward.1} parent=35 // pred_check_branch
        %982 = sbr.rel (%p980) target = $region40
      $region39: #{rebnconv_forward.1} parent=35 // pred_region
        %s983 = smul.u32 8, %s20
      $region40: #{rebnconv_forward.1} parent=35 // pred_fallthru
        _
    $region36: #{rebnconv_forward.1} parent=5 // pred_fallthru
      _
    %p984 = scmp.le.s32.totalorder 2, %s10
    // Predicated region
    $region41: #{rebnconv_forward.1} parent=5 // pred_check
      %p985 = pneg %p984
    $region42: #{rebnconv_forward.1} parent=5 // pred_check_branch
      %987 = sbr.rel (%p985) target = $region44
    $region43: #{rebnconv_forward.1} parent=5 // pred_region
      %s988 = ssub.s32 %s10, 2
      // Predicated region
      $region45: #{rebnconv_forward.1} parent=43 // pred_check
        %p989 = pneg %p142
      $region46: #{rebnconv_forward.1} parent=43 // pred_check_branch
        %991 = sbr.rel (%p989) target = $region48
      $region47: #{rebnconv_forward.1} parent=43 // pred_region
        %s992 = smul.u32 8, %s22
        %p993 = scmp.lt.s32.totalorder %s21, 1
        %s994 = scalar_select %p993, %s21, 1
        %p995 = scmp.lt.s32.totalorder %s992, 15
        %s996 = scalar_select %p995, %s992, 15
        %s997 = smul.addr %s996, 2
        %s998 = smul.addr %s994, 32
        %s999 = sadd.s32 %s997, %s998
        %s1000 = smul.addr %s999, 8
        %s1001 = scalar_lea.vmem %s4, %s1000
      $region48: #{rebnconv_forward.1} parent=43 // pred_fallthru
        _
    $region44: #{rebnconv_forward.1} parent=5 // pred_fallthru
      _
  $region6: #{rebnconv_forward.1} parent=0 // loop_footer
    %s14 = sadd.s32 1, %s10
  $region7: #{rebnconv_forward.1} parent=0 // loop_footer_branch
    %9 = sbr.rel target = $region3
  $region8: #{rebnconv_forward.1} parent=0 // loop_exit
    _

// kernel: rebnconv_forward.1
$region0: #{rebnconv_forward.1}
  #allocation0 [shape = 'u32[]', space=smem, size = 0x4, offset = 0x4, fixed_abs, tag = 'smem constant byte address 0x4 - core index']
  #allocation1 [shape = 'u32[144,128]{1,0:T(1,128)}', space=vmem, size = 0x12000, scoped, tag = 'internal scratch']
  %s0 = inlined_call_operand.vmem [shape: bf16[2,18,18,4], index: 0, kind: input, shape index: {}]
  %s1 = inlined_call_operand.vmem [shape: bf16[36,16], index: 1, kind: input, shape index: {}]
  %s2 = inlined_call_operand.vmem [shape: f32[1,16], index: 2, kind: input, shape index: {}]
  %s3 = inlined_call_operand.vmem [shape: f32[1,16], index: 3, kind: input, shape index: {}]
  %s4 = inlined_call_operand.vmem [shape: f32[2,16,16,16], index: 4, kind: output, shape index: {}]
  %s5 = sld [smem:[#allocation0]]
  $region49: #{rebnconv_forward.1} parent=0
    _
  %s7 = ssub.s32 1, %s5
  %s8 = scalar_select 0, %s7, %s5
  loop: start=0, step=1, limit=6
  $region2: #{rebnconv_forward.1} parent=0 // loop_pre_header
    _
  $region3: #{rebnconv_forward.1} parent=0 // loop_header
    %s10 = sphi 0, %s14
    %p11 = scmp.ge.s32.totalorder %s10, 6
    %s17 = sphi 0, %s29
    %s18 = sphi 0, %s25
    %s19 = sphi 0, %s17
    %s20 = sphi 0, %s18
    %s21 = sphi 0, %s19
    %s22 = sphi 0, %s20
    %s32 = sphi 0, %s34
    %s35 = sphi 0, %s32
    %s36 = sphi 0, %s35
    %s52 = sphi 0, %s36
    %s56 = sphi 0, %s56
    %s58 = sphi 0, %s56
    %s59 = sphi 0, %s58
    %s73 = sphi 0, %s59
    %s77 = sphi 0, %s77
    %s79 = sphi 0, %s77
    %s80 = sphi 0, %s79
    %s94 = sphi 0, %s80
    %s98 = sphi 0, %s98
    %s100 = sphi 0, %s98
    %s101 = sphi 0, %s100
    %s115 = sphi 0, %s101
    %s123 = sphi 0, %s125
    %s126 = sphi 0, %s123
    %s127 = sphi 0, %s126
    %s143 = sphi 0, %s127
  $region4: #{rebnconv_forward.1} parent=0 // loop_header_branch
    %13 = sbr.rel (%p11) target = $region8
  $region5: #{rebnconv_forward.1} parent=0 // loop_body
    %s15 = ssub.s32 %s10, 1
    %s16 = ssub.s32 %s10, 2
    %s23 = sadd.s32 1, %s18
    %p24 = scmp.ge.s32.totalorder %s23, 2
    %s25 = scalar_select %p24, 0, %s23
    %s26 = sadd.s32 1, %s17
    %s27 = scalar_select %p24, %s26, %s17
    %p28 = scmp.ge.s32.totalorder %s27, 2
    %s29 = scalar_select %p28, 0, %s27
    %s30 = ssub.s32 %s17, %s29
    %p31 = scmp.eq.s32.totalorder %s30, 0
    %s33 = sadd.s32 %s32, 1
    %s34 = scalar_select %p31, %s32, %s33
    %p37 = pneg %p31
    %p38 = scmp.eq.s32.totalorder %s10, 3
    %p39 = por %p37, %p38
    %p40 = scmp.ne.s32.totalorder %s32, %s35
    %p41 = scmp.eq.s32.totalorder %s10, 0
    %p42 = por %p40, %p41
    %p43 = scmp.ne.s32.totalorder %s32, %s35
    %p44 = scmp.eq.s32.totalorder %s15, 3
    %p45 = por %p43, %p44
    %p46 = scmp.ne.s32.totalorder %s35, %s36
    %p47 = scmp.eq.s32.totalorder %s15, 0
    %p48 = por %p46, %p47
    %p49 = scmp.ne.s32.totalorder %s35, %s36
    %p50 = scmp.eq.s32.totalorder %s16, 3
    %p51 = por %p49, %p50
    %p53 = scmp.ne.s32.totalorder %s36, %s52
    %p54 = scmp.eq.s32.totalorder %s16, 0
    %p55 = por %p53, %p54
    %s57 = sadd.s32 %s56, 1
    %p60 = scmp.eq.s32.totalorder %s10, 3
    %p61 = scmp.ne.s32.totalorder %s56, %s58
    %p62 = scmp.eq.s32.totalorder %s10, 0
    %p63 = por %p61, %p62
    %p64 = scmp.ne.s32.totalorder %s56, %s58
    %p65 = scmp.eq.s32.totalorder %s15, 3
    %p66 = por %p64, %p65
    %p67 = scmp.ne.s32.totalorder %s58, %s59
    %p68 = scmp.eq.s32.totalorder %s15, 0
    %p69 = por %p67, %p68
    %p70 = scmp.ne.s32.totalorder %s58, %s59
    %p71 = scmp.eq.s32.totalorder %s16, 3
    %p72 = por %p70, %p71
    %p74 = scmp.ne.s32.totalorder %s59, %s73
    %p75 = scmp.eq.s32.totalorder %s16, 0
    %p76 = por %p74, %p75
    %s78 = sadd.s32 %s77, 1
    %p81 = scmp.eq.s32.totalorder %s10, 3
    %p82 = scmp.ne.s32.totalorder %s77, %s79
    %p83 = scmp.eq.s32.totalorder %s10, 0
    %p84 = por %p82, %p83
    %p85 = scmp.ne.s32.totalorder %s77, %s79
    %p86 = scmp.eq.s32.totalorder %s15, 3
    %p87 = por %p85, %p86
    %p88 = scmp.ne.s32.totalorder %s79, %s80
    %p89 = scmp.eq.s32.totalorder %s15, 0
    %p90 = por %p88, %p89
    %p91 = scmp.ne.s32.totalorder %s79, %s80
    %p92 = scmp.eq.s32.totalorder %s16, 3
    %p93 = por %p91, %p92
    %p95 = scmp.ne.s32.totalorder %s80, %s94
    %p96 = scmp.eq.s32.totalorder %s16, 0
    %p97 = por %p95, %p96
    %s99 = sadd.s32 %s98, 1
    %p102 = scmp.eq.s32.totalorder %s10, 3
    %p103 = scmp.ne.s32.totalorder %s98, %s100
    %p104 = scmp.eq.s32.totalorder %s10, 0
    %p105 = por %p103, %p104
    %p106 = scmp.ne.s32.totalorder %s98, %s100
    %p107 = scmp.eq.s32.totalorder %s15, 3
    %p108 = por %p106, %p107
    %p109 = scmp.ne.s32.totalorder %s100, %s101
    %p110 = scmp.eq.s32.totalorder %s15, 0
    %p111 = por %p109, %p110
    %p112 = scmp.ne.s32.totalorder %s100, %s101
    %p113 = scmp.eq.s32.totalorder %s16, 3
    %p114 = por %p112, %p113
    %p116 = scmp.ne.s32.totalorder %s101, %s115
    %p117 = scmp.eq.s32.totalorder %s16, 0
    %p118 = por %p116, %p117
    %s119 = ssub.s32 %s17, %s29
    %s120 = ssub.s32 %s18, %s25
    %s121 = sor.u32 %s119, %s120
    %p122 = scmp.eq.s32.totalorder %s121, 0
    %s124 = sadd.s32 %s123, 1
    %s125 = scalar_select %p122, %s123, %s124
    %p128 = pneg %p122
    %p129 = scmp.eq.s32.totalorder %s10, 3
    %p130 = por %p128, %p129
    %p131 = scmp.ne.s32.totalorder %s123, %s126
    %p132 = scmp.eq.s32.totalorder %s10, 0
    %p133 = por %p131, %p132
    %p134 = scmp.ne.s32.totalorder %s123, %s126
    %p135 = scmp.eq.s32.totalorder %s15, 3
    %p136 = por %p134, %p135
    %p137 = scmp.ne.s32.totalorder %s126, %s127
    %p138 = scmp.eq.s32.totalorder %s15, 0
    %p139 = por %p137, %p138
    %p140 = scmp.ne.s32.totalorder %s126, %s127
    %p141 = scmp.eq.s32.totalorder %s16, 3
    %p142 = por %p140, %p141
    %p144 = scmp.ne.s32.totalorder %s127, %s143
    %p145 = scmp.eq.s32.totalorder %s16, 0
    %p146 = por %p144, %p145
    %p147 = scmp.le.s32.totalorder 1, %s10
    %p148 = scmp.lt.s32.totalorder %s10, 5
    %p149 = pnand %p147, %p148
    %p150 = pneg %p149
    // Predicated region
    $region9: #{rebnconv_forward.1} parent=5 // pred_check
      _
    $region10: #{rebnconv_forward.1} parent=5 // pred_check_branch
      %152 = sbr.rel (%p149) target = $region12
    $region11: #{rebnconv_forward.1} parent=5 // pred_region
      %s153 = ssub.s32 %s10, 1
      // Predicated region
      $region13: #{rebnconv_forward.1} parent=11 // pred_check
        %p154 = pneg %p69
      $region14: #{rebnconv_forward.1} parent=11 // pred_check_branch
        %156 = sbr.rel (%p154) target = $region16
      $region15: #{rebnconv_forward.1} parent=11 // pred_region
        _
      $region16: #{rebnconv_forward.1} parent=11 // pred_fallthru
        _
      // Predicated region
      $region17: #{rebnconv_forward.1} parent=11 // pred_check
        %p157 = pneg %p90
      $region18: #{rebnconv_forward.1} parent=11 // pred_check_branch
        %159 = sbr.rel (%p157) target = $region20
      $region19: #{rebnconv_forward.1} parent=11 // pred_region
        _
      $region20: #{rebnconv_forward.1} parent=11 // pred_fallthru
        _
      // Predicated region
      $region21: #{rebnconv_forward.1} parent=11 // pred_check
        %p160 = pneg %p111
      $region22: #{rebnconv_forward.1} parent=11 // pred_check_branch
        %162 = sbr.rel (%p160) target = $region24
      $region23: #{rebnconv_forward.1} parent=11 // pred_region
        _
      $region24: #{rebnconv_forward.1} parent=11 // pred_fallthru
        _
    $region12: #{rebnconv_forward.1} parent=5 // pred_fallthru
      _
    %p163 = scmp.lt.s32.totalorder %s10, 4
    // Predicated region
    $region25: #{rebnconv_forward.1} parent=5 // pred_check
      %p164 = pneg %p163
    $region26: #{rebnconv_forward.1} parent=5 // pred_check_branch
      %166 = sbr.rel (%p164) target = $region28
    $region27: #{rebnconv_forward.1} parent=5 // pred_region
      // Predicated region
      $region29: #{rebnconv_forward.1} parent=27 // pred_check
        %p167 = pneg %p42
      $region30: #{rebnconv_forward.1} parent=27 // pred_check_branch
        %169 = sbr.rel (%p167) target = $region32
      $region31: #{rebnconv_forward.1} parent=27 // pred_region
        %p170 = scmp.lt.s32.totalorder %s17, 1
        %s171 = scalar_select %p170, %s17, 1
        %s172 = smul.addr %s171, 54
        %s173 = smul.addr %s172, 4
        %s174 = scalar_lea.vmem %s0, %s173
      $region32: #{rebnconv_forward.1} parent=27 // pred_fallthru
        _
    $region28: #{rebnconv_forward.1} parent=5 // pred_fallthru
      _
    %p175 = scmp.le.s32.totalorder 1, %s10
    %p176 = scmp.lt.s32.totalorder %s10, 5
    %p177 = pnand %p175, %p176
    %p178 = pneg %p177
    // Predicated region
    $region33: #{rebnconv_forward.1} parent=5 // pred_check
      _
    $region34: #{rebnconv_forward.1} parent=5 // pred_check_branch
      %180 = sbr.rel (%p177) target = $region36
    $region35: #{rebnconv_forward.1} parent=5 // pred_region
      %s181 = ssub.s32 %s10, 1
      %p182 = scmp.lt.s32.totalorder %s19, 1
      %s183 = scalar_select %p182, %s19, 1
      %s184 = smul.addr %s183, 54
      %s185 = smul.addr %s184, 4
      %s186 = scalar_lea.vmem %s0, %s185
      %p187 = pneg %p48
      %p188 = pneg %p45
      %p189 = pneg %p69
      %p190 = pneg %p66
      %p191 = pneg %p90
      %p192 = pneg %p87
      %p193 = pneg %p111
      %p194 = pneg %p108
      %p195 = pneg %p139
      %p196 = pneg %p136
      %s197 = smul.u32 8, %s20
      %p198 = scmp.lt.s32.totalorder %s19, 1
      %s199 = scalar_select %p198, %s19, 1
      %p200 = scmp.lt.s32.totalorder %s197, 15
      %s201 = scalar_select %p200, %s197, 15
      %s202 = smul.addr %s201, 2
      %s203 = smul.addr %s199, 32
      %s204 = sadd.s32 %s202, %s203
      %s205 = smul.addr %s204, 8
      %s206 = scalar_lea.vmem %s4, %s205
      %p207 = scmp.lt.s32.totalorder %s19, 1
      %s208 = scalar_select %p207, %s19, 1
      %s209 = smul.addr %s208, 54
      %s210 = smul.addr %s209, 4
      %s211 = scalar_lea.vmem %s0, %s210
      %s212 = smul.u32 8, %s20
      %p213 = scmp.lt.s32.totalorder %s19, 1
      %s214 = scalar_select %p213, %s19, 1
      %p215 = scmp.lt.s32.totalorder %s212, 15
      %s216 = scalar_select %p215, %s212, 15
      %s217 = smul.addr %s216, 2
      %s218 = smul.addr %s214, 32
      %s219 = sadd.s32 %s217, %s218
      %s220 = smul.addr %s219, 8
      %s221 = scalar_lea.vmem %s4, %s220
      %s222 = smul.u32 8, %s20
      %s224 = smul.u32 %s20, 8
      %s225 = smul.u32 %s224, 3
      %s226 = smul.addr %s225, 4
      %s227 = scalar_lea.vmem %s211, %s226
      %v228 = vld [vmem:[%s227] sm:$0xf]
      %v229 = vld [vmem:[%s227 + $0x4] sm:$0xf]
      %v230 = vld [vmem:[%s227 + $0x8] sm:$0x1]
      %v231 = vld [vmem:[%s227 + $0xc] sm:$0xf]
      %v232 = vld [vmem:[%s227 + $0x10] sm:$0xf]
      %v233 = vld [vmem:[%s227 + $0x14] sm:$0x1]
      %v234 = vld [vmem:[%s227 + $0x18] sm:$0xf]
      %v235 = vld [vmem:[%s227 + $0x1c] sm:$0xf]
      %v236 = vld [vmem:[%s227 + $0x20] sm:$0x1]
      %v237 = vld [vmem:[%s227 + $0x24] sm:$0xf]
      %v238 = vld [vmem:[%s227 + $0x28] sm:$0xf]
      %v239 = vld [vmem:[%s227 + $0x2c] sm:$0x1]
      %v240 = vld [vmem:[%s227 + $0x30] sm:$0xf]
      %v241 = vld [vmem:[%s227 + $0x34] sm:$0xf]
      %v242 = vld [vmem:[%s227 + $0x38] sm:$0x1]
      %v243 = vld [vmem:[%s227 + $0x3c] sm:$0xf]
      %v244 = vld [vmem:[%s227 + $0x40] sm:$0xf]
      %v245 = vld [vmem:[%s227 + $0x44] sm:$0x1]
      %v246 = vld [vmem:[%s227 + $0x48] sm:$0xf]
      %v247 = vld [vmem:[%s227 + $0x4c] sm:$0xf]
      %v248 = vld [vmem:[%s227 + $0x50] sm:$0x1]
      %v249 = vld [vmem:[%s227 + $0x54] sm:$0xf]
      %v250 = vld [vmem:[%s227 + $0x58] sm:$0xf]
      %v251 = vld [vmem:[%s227 + $0x5c] sm:$0x1]
      %v252 = vld [vmem:[%s227 + $0x60] sm:$0xf]
      %v253 = vld [vmem:[%s227 + $0x64] sm:$0xf]
      %v254 = vld [vmem:[%s227 + $0x68] sm:$0x1]
      %v255 = vld [vmem:[%s227 + $0x6c] sm:$0xf]
      %v256 = vld [vmem:[%s227 + $0x70] sm:$0xf]
      %v257 = vld [vmem:[%s227 + $0x74] sm:$0x1]
      %v258 = vld [vmem:[%s1] sm:$0xf]
      %v259 = vld [vmem:[%s1 + $0x4] sm:$0xf]
      %v260 = vld [vmem:[%s1 + $0x8] sm:$0xf]
      %v261 = vld [vmem:[%s1 + $0xc] sm:$0xf]
      %v262 = vld [vmem:[%s1 + $0x10] sm:$0x3]
      %vm263 = vsmask.f32 3328
      %vm264 = vsmask.f32 7440
      %vm265 = vmor %vm263, %vm264
      %v267 = vshrl.u32 %v228, 16
      %v269 = vrot.slane %v267, 4
      %v270 = vshll.u32 %v228, 16
      %v272 = vrot.slane %v270, 5
      %v273 = vor.u32 %v269, %v272
      %v274 = vrot.slane %v273, 4
      %v276 = vshll.u32 %v229, 16
      %v278 = vrot.slane %v276, 5
      %v279 = vsel %vm265, %v274, %v278
      %v280 = vshrl.u32 %v229, 16
      %v282 = vrot.slane %v280, 4
      %v283 = vor.u32 %v282, %v278
      %v284 = vrot.slane %v283, 4
      %v286 = vshll.u32 %v230, 16
      %v288 = vrot.slane %v286, 5
      %v289 = vsel %vm265, %v284, %v288
      %v291 = vshrl.u32 %v231, 16
      %v293 = vrot.slane %v291, 4
      %v294 = vshll.u32 %v231, 16
      %v296 = vrot.slane %v294, 5
      %v297 = vor.u32 %v293, %v296
      %v298 = vrot.slane %v297, 4
      %v300 = vshll.u32 %v232, 16
      %v302 = vrot.slane %v300, 5
      %v303 = vsel %vm265, %v298, %v302
      %v304 = vshrl.u32 %v232, 16
      %v306 = vrot.slane %v304, 4
      %v307 = vor.u32 %v306, %v302
      %v308 = vrot.slane %v307, 4
      %v310 = vshll.u32 %v233, 16
      %v312 = vrot.slane %v310, 5
      %v313 = vsel %vm265, %v308, %v312
      %v315 = vshrl.u32 %v234, 16
      %v317 = vrot.slane %v315, 4
      %v318 = vshll.u32 %v234, 16
      %v320 = vrot.slane %v318, 5
      %v321 = vor.u32 %v317, %v320
      %v322 = vrot.slane %v321, 4
      %v324 = vshll.u32 %v235, 16
      %v326 = vrot.slane %v324, 5
      %v327 = vsel %vm265, %v322, %v326
      %v328 = vshrl.u32 %v235, 16
      %v330 = vrot.slane %v328, 4
      %v331 = vor.u32 %v330, %v326
      %v332 = vrot.slane %v331, 4
      %v334 = vshll.u32 %v236, 16
      %v336 = vrot.slane %v334, 5
      %v337 = vsel %vm265, %v332, %v336
      %v339 = vshrl.u32 %v237, 16
      %v341 = vrot.slane %v339, 4
      %v342 = vshll.u32 %v237, 16
      %v344 = vrot.slane %v342, 5
      %v345 = vor.u32 %v341, %v344
      %v346 = vrot.slane %v345, 4
      %v348 = vshll.u32 %v238, 16
      %v350 = vrot.slane %v348, 5
      %v351 = vsel %vm265, %v346, %v350
      %v352 = vshrl.u32 %v238, 16
      %v354 = vrot.slane %v352, 4
      %v355 = vor.u32 %v354, %v350
      %v356 = vrot.slane %v355, 4
      %v358 = vshll.u32 %v239, 16
      %v360 = vrot.slane %v358, 5
      %v361 = vsel %vm265, %v356, %v360
      %v363 = vshrl.u32 %v240, 16
      %v365 = vrot.slane %v363, 4
      %v366 = vshll.u32 %v240, 16
      %v368 = vrot.slane %v366, 5
      %v369 = vor.u32 %v365, %v368
      %v370 = vrot.slane %v369, 4
      %v372 = vshll.u32 %v241, 16
      %v374 = vrot.slane %v372, 5
      %v375 = vsel %vm265, %v370, %v374
      %v376 = vshrl.u32 %v241, 16
      %v378 = vrot.slane %v376, 4
      %v379 = vor.u32 %v378, %v374
      %v380 = vrot.slane %v379, 4
      %v382 = vshll.u32 %v242, 16
      %v384 = vrot.slane %v382, 5
      %v385 = vsel %vm265, %v380, %v384
      %v387 = vshrl.u32 %v243, 16
      %v389 = vrot.slane %v387, 4
      %v390 = vshll.u32 %v243, 16
      %v392 = vrot.slane %v390, 5
      %v393 = vor.u32 %v389, %v392
      %v394 = vrot.slane %v393, 4
      %v396 = vshll.u32 %v244, 16
      %v398 = vrot.slane %v396, 5
      %v399 = vsel %vm265, %v394, %v398
      %v400 = vshrl.u32 %v244, 16
      %v402 = vrot.slane %v400, 4
      %v403 = vor.u32 %v402, %v398
      %v404 = vrot.slane %v403, 4
      %v406 = vshll.u32 %v245, 16
      %v408 = vrot.slane %v406, 5
      %v409 = vsel %vm265, %v404, %v408
      %v411 = vshrl.u32 %v246, 16
      %v413 = vrot.slane %v411, 4
      %v414 = vshll.u32 %v246, 16
      %v416 = vrot.slane %v414, 5
      %v417 = vor.u32 %v413, %v416
      %v418 = vrot.slane %v417, 4
      %v420 = vshll.u32 %v247, 16
      %v422 = vrot.slane %v420, 5
      %v423 = vsel %vm265, %v418, %v422
      %v424 = vshrl.u32 %v247, 16
      %v426 = vrot.slane %v424, 4
      %v427 = vor.u32 %v426, %v422
      %v428 = vrot.slane %v427, 4
      %v430 = vshll.u32 %v248, 16
      %v432 = vrot.slane %v430, 5
      %v433 = vsel %vm265, %v428, %v432
      %v435 = vshrl.u32 %v249, 16
      %v437 = vrot.slane %v435, 4
      %v438 = vshll.u32 %v249, 16
      %v440 = vrot.slane %v438, 5
      %v441 = vor.u32 %v437, %v440
      %v442 = vrot.slane %v441, 4
      %v444 = vshll.u32 %v250, 16
      %v446 = vrot.slane %v444, 5
      %v447 = vsel %vm265, %v442, %v446
      %v448 = vshrl.u32 %v250, 16
      %v450 = vrot.slane %v448, 4
      %v451 = vor.u32 %v450, %v446
      %v452 = vrot.slane %v451, 4
      %v454 = vshll.u32 %v251, 16
      %v456 = vrot.slane %v454, 5
      %v457 = vsel %vm265, %v452, %v456
      %v458 = vunpack.c.l.b16 %v279
      %v459 = vunpack.c.l.b16 %v289
      %v460 = vunpack.c.l.b16 %v303
      %v461 = vunpack.c.l.b16 %v313
      %v462 = vunpack.c.l.b16 %v327
      %v463 = vunpack.c.l.b16 %v337
      %v464 = vunpack.c.l.b16 %v351
      %v465 = vunpack.c.l.b16 %v361
      %v466 = vunpack.c.l.b16 %v375
      %v467 = vunpack.c.l.b16 %v385
      %v468 = vunpack.c.l.b16 %v399
      %v469 = vunpack.c.l.b16 %v409
      %v470 = vunpack.c.l.b16 %v423
      %v471 = vunpack.c.l.b16 %v433
      %v472 = vunpack.c.l.b16 %v447
      %v473 = vunpack.c.l.b16 %v457
      %v474 = vpack.c.b16 %v459, %v458
      %v475 = vpack.c.b16 %v461, %v460
      %v476 = vpack.c.b16 %v463, %v462
      %v477 = vpack.c.b16 %v465, %v464
      %v478 = vpack.c.b16 %v467, %v466
      %v479 = vpack.c.b16 %v469, %v468
      %v480 = vpack.c.b16 %v471, %v470
      %v481 = vpack.c.b16 %v473, %v472
      %v483 = vunpack.c.l.b16 %v258
      %v484 = vpack.c.b16 %v483, %v483
      %v485 = vrot.slane %v484, 2
      %vm486 = vcmask 31744
      %v488 = vsel %vm486, %v474, 0
      %v491 = vsel %vm486, %v475, 0
      %v494 = vsel %vm486, %v476, 0
      %v497 = vsel %vm486, %v477, 0
      %v500 = vsel %vm486, %v478, 0
      %v503 = vsel %vm486, %v479, 0
      %v506 = vsel %vm486, %v480, 0
      %v509 = vsel %vm486, %v481, 0
      %vm511 = vcmask 1041408
      %v513 = vsel %vm511, %v485, 0
      %515 = vmatprep.subr.bf16.mxu0 0
      %516 = vmatpush1.bf16.msra.mxu0 %v513
      %517 = vmatprep.subr.bf16.mxu0 0
      %518 = vmatpush1.bf16.msra.mxu0 0
      %519 = vmatprep.subr.bf16.mxu0 0
      %520 = vmatpush1.bf16.msra.mxu0 0
      %521 = vmatprep.subr.bf16.mxu0 0
      %522 = vmatpush1.bf16.msra.mxu0 0
      %523 = vmatprep.subr.bf16.mxu0 0
      %524 = vmatpush1.bf16.msra.mxu0 0
      %525 = vmatprep.subr.bf16.mxu0 0
      %526 = vmatpush1.bf16.msra.mxu0 0
      %527 = vmatprep.subr.bf16.mxu0 0
      %528 = vmatpush1.bf16.msra.mxu0 0
      %529 = vmatprep.subr.bf16.mxu0 0
      %530 = vmatpush1.bf16.msra.mxu0 0
      %531 = vmatprep.subr.bf16.mxu0 0
      %532 = vmatpush1.bf16.msra.mxu0 0
      %533 = vmatprep.subr.bf16.mxu0 0
      %534 = vmatpush1.bf16.msra.mxu0 0
      %535 = vmatprep.subr.bf16.mxu0 0
      %536 = vmatpush1.bf16.msra.mxu0 0
      %537 = vmatprep.subr.bf16.mxu0 0
      %538 = vmatpush1.bf16.msra.mxu0 0
      %539 = vmatprep.subr.bf16.mxu0 0
      %540 = vmatpush1.bf16.msra.mxu0 0
      %541 = vmatprep.subr.bf16.mxu0 0
      %542 = vmatpush1.bf16.msra.mxu0 0
      %543 = vmatprep.subr.bf16.mxu0 0
      %544 = vmatpush1.bf16.msra.mxu0 0
      %545 = vmatprep.subr.bf16.mxu0 0
      %546 = vmatpush1.bf16.msra.mxu0 0
      %547 = vmatprep.mubr.bf16.mxu0 0
      %548 = vmatmul.mubr.bf16.gmra.mrb[0].mxu0 %v488
      %v549 = vpop.f32.mrb[0].mxu0
      %v550 = vadd.f32 0.0, %v549
      %v551 = vpop.f32.mrb[0].mxu0
      %v552 = vpop.f32.mrb[0].mxu0
      %v553 = vadd.f32 0.0, %v552
      %v554 = vpop.f32.mrb[0].mxu0
      %555 = vmatprep.mubr.bf16.mxu0 0
      %556 = vmatmul.mubr.bf16.gmra.mrb[0].mxu0 %v491
      %v557 = vpop.f32.mrb[0].mxu0
      %v558 = vadd.f32 0.0, %v557
      %v559 = vpop.f32.mrb[0].mxu0
      %v560 = vpop.f32.mrb[0].mxu0
      %v561 = vadd.f32 0.0, %v560
      %v562 = vpop.f32.mrb[0].mxu0
      %563 = vmatprep.mubr.bf16.mxu0 0
      %564 = vmatmul.mubr.bf16.gmra.mrb[0].mxu0 %v494
      %v565 = vpop.f32.mrb[0].mxu0
      %v566 = vadd.f32 0.0, %v565
      %v567 = vpop.f32.mrb[0].mxu0
      %v568 = vpop.f32.mrb[0].mxu0
      %v569 = vadd.f32 0.0, %v568
      %v570 = vpop.f32.mrb[0].mxu0
      %571 = vmatprep.mubr.bf16.mxu0 0
      %572 = vmatmul.mubr.bf16.gmra.mrb[0].mxu0 %v497
      %v573 = vpop.f32.mrb[0].mxu0
      %v574 = vadd.f32 0.0, %v573
      %v575 = vpop.f32.mrb[0].mxu0
      %v576 = vpop.f32.mrb[0].mxu0
      %v577 = vadd.f32 0.0, %v576
      %v578 = vpop.f32.mrb[0].mxu0
      %579 = vmatprep.mubr.bf16.mxu0 0
      %580 = vmatmul.mubr.bf16.gmra.mrb[0].mxu0 %v500
      %v581 = vpop.f32.mrb[0].mxu0
      %v582 = vadd.f32 0.0, %v581
      %v583 = vpop.f32.mrb[0].mxu0
      %v584 = vpop.f32.mrb[0].mxu0
      %v585 = vadd.f32 0.0, %v584
      %v586 = vpop.f32.mrb[0].mxu0
      %587 = vmatprep.mubr.bf16.mxu0 0
      %588 = vmatmul.mubr.bf16.gmra.mrb[0].mxu0 %v503
      %v589 = vpop.f32.mrb[0].mxu0
      %v590 = vadd.f32 0.0, %v589
      %v591 = vpop.f32.mrb[0].mxu0
      %v592 = vpop.f32.mrb[0].mxu0
      %v593 = vadd.f32 0.0, %v592
      %v594 = vpop.f32.mrb[0].mxu0
      %595 = vmatprep.mubr.bf16.mxu0 0
      %596 = vmatmul.mubr.bf16.gmra.mrb[0].mxu0 %v506
      %v597 = vpop.f32.mrb[0].mxu0
      %v598 = vadd.f32 0.0, %v597
      %v599 = vpop.f32.mrb[0].mxu0
      %v600 = vpop.f32.mrb[0].mxu0
      %v601 = vadd.f32 0.0, %v600
      %v602 = vpop.f32.mrb[0].mxu0
      %603 = vmatprep.mubr.bf16.mxu0 0
      %604 = vmatmul.mubr.bf16.gmra.mrb[0].mxu0 %v509
      %v605 = vpop.f32.mrb[0].mxu0
      %v606 = vadd.f32 0.0, %v605
      %v607 = vpop.f32.mrb[0].mxu0
      %v608 = vpop.f32.mrb[0].mxu0
      %v609 = vadd.f32 0.0, %v608
      %v610 = vpop.f32.mrb[0].mxu0
      %611 = vdwg.mxu0
      %v628 = vunpack.c.l.b16 %v228
      %v629 = vunpack.c.l.b16 %v229
      %v630 = vunpack.c.l.b16 %v231
      %v631 = vunpack.c.l.b16 %v232
      %v632 = vunpack.c.l.b16 %v234
      %v633 = vunpack.c.l.b16 %v235
      %v634 = vunpack.c.l.b16 %v237
      %v635 = vunpack.c.l.b16 %v238
      %v636 = vunpack.c.l.b16 %v240
      %v637 = vunpack.c.l.b16 %v241
      %v638 = vunpack.c.l.b16 %v243
      %v639 = vunpack.c.l.b16 %v244
      %v640 = vunpack.c.l.b16 %v246
      %v641 = vunpack.c.l.b16 %v247
      %v642 = vunpack.c.l.b16 %v249
      %v643 = vunpack.c.l.b16 %v250
      %v644 = vpack.c.b16 %v629, %v628
      %v645 = vpack.c.b16 %v631, %v630
      %v646 = vpack.c.b16 %v633, %v632
      %v647 = vpack.c.b16 %v635, %v634
      %v648 = vpack.c.b16 %v637, %v636
      %v649 = vpack.c.b16 %v639, %v638
      %v650 = vpack.c.b16 %v641, %v640
      %v651 = vpack.c.b16 %v643, %v642
      %v653 = vsel %vm486, %v644, 0
      %v656 = vsel %vm486, %v645, 0
      %v659 = vsel %vm486, %v646, 0
      %v662 = vsel %vm486, %v647, 0
      %v665 = vsel %vm486, %v648, 0
      %v668 = vsel %vm486, %v649, 0
      %v671 = vsel %vm486, %v650, 0
      %v674 = vsel %vm486, %v651, 0
      %v677 = vsel %vm511, %v258, 0
      %679 = vmatprep.subr.bf16.mxu0 0
      %680 = vmatpush1.bf16.msra.mxu0 %v677
      %681 = vmatprep.subr.bf16.mxu0 0
      %682 = vmatpush1.bf16.msra.mxu0 0
      %683 = vmatprep.subr.bf16.mxu0 0
      %684 = vmatpush1.bf16.msra.mxu0 0
      %685 = vmatprep.subr.bf16.mxu0 0
      %686 = vmatpush1.bf16.msra.mxu0 0
      %687 = vmatprep.subr.bf16.mxu0 0
      %688 = vmatpush1.bf16.msra.mxu0 0
      %689 = vmatprep.subr.bf16.mxu0 0
      %690 = vmatpush1.bf16.msra.mxu0 0
      %691 = vmatprep.subr.bf16.mxu0 0
      %692 = vmatpush1.bf16.msra.mxu0 0
      %693 = vmatprep.subr.bf16.mxu0 0
      %694 = vmatpush1.bf16.msra.mxu0 0
      %695 = vmatprep.subr.bf16.mxu0 0
      %696 = vmatpush1.bf16.msra.mxu0 0
      %697 = vmatprep.subr.bf16.mxu0 0
      %698 = vmatpush1.bf16.msra.mxu0 0
      %699 = vmatprep.subr.bf16.mxu0 0
      %700 = vmatpush1.bf16.msra.mxu0 0
      %701 = vmatprep.subr.bf16.mxu0 0
      %702 = vmatpush1.bf16.msra.mxu0 0
      %703 = vmatprep.subr.bf16.mxu0 0
      %704 = vmatpush1.bf16.msra.mxu0 0
      %705 = vmatprep.subr.bf16.mxu0 0
      %706 = vmatpush1.bf16.msra.mxu0 0
      %707 = vmatprep.subr.bf16.mxu0 0
      %708 = vmatpush1.bf16.msra.mxu0 0
      %709 = vmatprep.subr.bf16.mxu0 0
      %710 = vmatpush1.bf16.msra.mxu0 0
      %711 = vmatprep.mubr.bf16.mxu0 0
      %712 = vmatmul.mubr.bf16.gmra.mrb[0].mxu0 %v653
      %v713 = vpop.f32.mrb[0].mxu0
      %v714 = vadd.f32 %v550, %v713
      %v715 = vpop.f32.mrb[0].mxu0
      %v716 = vpop.f32.mrb[0].mxu0
      %v717 = vadd.f32 %v553, %v716
      %v718 = vpop.f32.mrb[0].mxu0
      %719 = vmatprep.mubr.bf16.mxu0 0
      %720 = vmatmul.mubr.bf16.gmra.mrb[0].mxu0 %v656
      %v721 = vpop.f32.mrb[0].mxu0
      %v722 = vadd.f32 %v558, %v721
      %v723 = vpop.f32.mrb[0].mxu0
      %v724 = vpop.f32.mrb[0].mxu0
      %v725 = vadd.f32 %v561, %v724
      %v726 = vpop.f32.mrb[0].mxu0
      %727 = vmatprep.mubr.bf16.mxu0 0
      %728 = vmatmul.mubr.bf16.gmra.mrb[0].mxu0 %v659
      %v729 = vpop.f32.mrb[0].mxu0
      %v730 = vadd.f32 %v566, %v729
      %v731 = vpop.f32.mrb[0].mxu0
      %v732 = vpop.f32.mrb[0].mxu0
      %v733 = vadd.f32 %v569, %v732
      %v734 = vpop.f32.mrb[0].mxu0
      %735 = vmatprep.mubr.bf16.mxu0 0
      %736 = vmatmul.mubr.bf16.gmra.mrb[0].mxu0 %v662
      %v737 = vpop.f32.mrb[0].mxu0
      %v738 = vadd.f32 %v574, %v737
      %v739 = vpop.f32.mrb[0].mxu0
      %v740 = vpop.f32.mrb[0].mxu0
      %v741 = vadd.f32 %v577, %v740
      %v742 = vpop.f32.mrb[0].mxu0
      %743 = vmatprep.mubr.bf16.mxu0 0
      %744 = vmatmul.mubr.bf16.gmra.mrb[0].mxu0 %v665
      %v745 = vpop.f32.mrb[0].mxu0
      %v746 = vadd.f32 %v582, %v745
      %v747 = vpop.f32.mrb[0].mxu0
      %v748 = vpop.f32.mrb[0].mxu0
      %v749 = vadd.f32 %v585, %v748
      %v750 = vpop.f32.mrb[0].mxu0
      %751 = vmatprep.mubr.bf16.mxu0 0
      %752 = vmatmul.mubr.bf16.gmra.mrb[0].mxu0 %v668
      %v753 = vpop.f32.mrb[0].mxu0
      %v754 = vadd.f32 %v590, %v753
      %v755 = vpop.f32.mrb[0].mxu0
      %v756 = vpop.f32.mrb[0].mxu0
      %v757 = vadd.f32 %v593, %v756
      %v758 = vpop.f32.mrb[0].mxu0
      %759 = vmatprep.mubr.bf16.mxu0 0
      %760 = vmatmul.mubr.bf16.gmra.mrb[0].mxu0 %v671
      %v761 = vpop.f32.mrb[0].mxu0
      %v762 = vadd.f32 %v598, %v761
      %v763 = vpop.f32.mrb[0].mxu0
      %v764 = vpop.f32.mrb[0].mxu0
      %v765 = vadd.f32 %v601, %v764
      %v766 = vpop.f32.mrb[0].mxu0
      %767 = vmatprep.mubr.bf16.mxu0 0
      %768 = vmatmul.mubr.bf16.gmra.mrb[0].mxu0 %v674
      %v769 = vpop.f32.mrb[0].mxu0
      %v770 = vadd.f32 %v606, %v769
      %v771 = vpop.f32.mrb[0].mxu0
      %v772 = vpop.f32.mrb[0].mxu0
      %v773 = vadd.f32 %v609, %v772
      %v774 = vpop.f32.mrb[0].mxu0
      %775 = vdwg.mxu0
      %vm784 = vcmask 1042432
      %vm785 = vcmask 1046532
      %vm786 = vmor %vm784, %vm785
      %v787 = vrot.slane %v228, 5
      %v788 = vrot.slane %v787, 4
      %v789 = vrot.slane %v229, 5
      %v790 = vsel %vm786, %v788, %v789
      %v791 = vrot.slane %v789, 4
      %v792 = vrot.slane %v230, 5
      %v793 = vsel %vm786, %v791, %v792
      %v794 = vrot.slane %v231, 5
      %v795 = vrot.slane %v794, 4
      %v796 = vrot.slane %v232, 5
      %v797 = vsel %vm786, %v795, %v796
      %v798 = vrot.slane %v796, 4
      %v799 = vrot.slane %v233, 5
      %v800 = vsel %vm786, %v798, %v799
      %v801 = vrot.slane %v234, 5
      %v802 = vrot.slane %v801, 4
      %v803 = vrot.slane %v235, 5
      %v804 = vsel %vm786, %v802, %v803
      %v805 = vrot.slane %v803, 4
      %v806 = vrot.slane %v236, 5
      %v807 = vsel %vm786, %v805, %v806
      %v808 = vrot.slane %v237, 5
      %v809 = vrot.slane %v808, 4
      %v810 = vrot.slane %v238, 5
      %v811 = vsel %vm786, %v809, %v810
      %v812 = vrot.slane %v810, 4
      %v813 = vrot.slane %v239, 5
      %v814 = vsel %vm786, %v812, %v813
      %v815 = vrot.slane %v240, 5
      %v816 = vrot.slane %v815, 4
      %v817 = vrot.slane %v241, 5
      %v818 = vsel %vm786, %v816, %v817
      %v819 = vrot.slane %v817, 4
      %v820 = vrot.slane %v242, 5
      %v821 = vsel %vm786, %v819, %v820
      %v822 = vrot.slane %v243, 5
      %v823 = vrot.slane %v822, 4
      %v824 = vrot.slane %v244, 5
      %v825 = vsel %vm786, %v823, %v824
      %v826 = vrot.slane %v824, 4
      %v827 = vrot.slane %v245, 5
      %v828 = vsel %vm786, %v826, %v827
      %v829 = vrot.slane %v246, 5
      %v830 = vrot.slane %v829, 4
      %v831 = vrot.slane %v247, 5
      %v832 = vsel %vm786, %v830, %v831
      %v833 = vrot.slane %v831, 4
      %v834 = vrot.slane %v248, 5
      %v835 = vsel %vm786, %v833, %v834
      %v836 = vrot.slane %v249, 5
      %v837 = vrot.slane %v836, 4
      %v838 = vrot.slane %v250, 5
      %v839 = vsel %vm786, %v837, %v838
      %v840 = vrot.slane %v838, 4
      %v841 = vrot.slane %v251, 5
      %v842 = vsel %vm786, %v840, %v841
      %v843 = vunpack.c.l.b16 %v790
      %v844 = vunpack.c.l.b16 %v793
      %v845 = vunpack.c.l.b16 %v797
      %v846 = vunpack.c.l.b16 %v800
      %v847 = vunpack.c.l.b16 %v804
      %v848 = vunpack.c.l.b16 %v807
      %v849 = vunpack.c.l.b16 %v811
      %v850 = vunpack.c.l.b16 %v814
      %v851 = vunpack.c.l.b16 %v818
      %v852 = vunpack.c.l.b16 %v821
      %v853 = vunpack.c.l.b16 %v825
      %v854 = vunpack.c.l.b16 %v828
      %v855 = vunpack.c.l.b16 %v832
      %v856 = vunpack.c.l.b16 %v835
      %v857 = vunpack.c.l.b16 %v839
      %v858 = vunpack.c.l.b16 %v842
      %v859 = vpack.c.b16 %v844, %v843
      %v860 = vpack.c.b16 %v846, %v845
      %v861 = vpack.c.b16 %v848, %v847
      %v862 = vpack.c.b16 %v850, %v849
      %v863 = vpack.c.b16 %v852, %v851
      %v864 = vpack.c.b16 %v854, %v853
      %v865 = vpack.c.b16 %v856, %v855
      %v866 = vpack.c.b16 %v858, %v857
      %v868 = vsel %vm486, %v859, 0
      %v871 = vsel %vm486, %v860, 0
      %v874 = vsel %vm486, %v861, 0
      %v877 = vsel %vm486, %v862, 0
      %v880 = vsel %vm486, %v863, 0
      %v883 = vsel %vm486, %v864, 0
      %v886 = vsel %vm486, %v865, 0
      %v889 = vsel %vm486, %v866, 0
      %v892 = vsel %vm511, %v259, 0
      %894 = vmatprep.subr.bf16.mxu0 0
      %895 = vmatpush1.bf16.msra.mxu0 %v892
      %896 = vmatprep.subr.bf16.mxu0 0
      %897 = vmatpush1.bf16.msra.mxu0 0
      %898 = vmatprep.subr.bf16.mxu0 0
      %899 = vmatpush1.bf16.msra.mxu0 0
      %900 = vmatprep.subr.bf16.mxu0 0
      %901 = vmatpush1.bf16.msra.mxu0 0
      %902 = vmatprep.subr.bf16.mxu0 0
      %903 = vmatpush1.bf16.msra.mxu0 0
      %904 = vmatprep.subr.bf16.mxu0 0
      %905 = vmatpush1.bf16.msra.mxu0 0
      %906 = vmatprep.subr.bf16.mxu0 0
      %907 = vmatpush1.bf16.msra.mxu0 0
      %908 = vmatprep.subr.bf16.mxu0 0
      %909 = vmatpush1.bf16.msra.mxu0 0
      %910 = vmatprep.subr.bf16.mxu0 0
      %911 = vmatpush1.bf16.msra.mxu0 0
      %912 = vmatprep.subr.bf16.mxu0 0
      %913 = vmatpush1.bf16.msra.mxu0 0
      %914 = vmatprep.subr.bf16.mxu0 0
      %915 = vmatpush1.bf16.msra.mxu0 0
      %916 = vmatprep.subr.bf16.mxu0 0
      %917 = vmatpush1.bf16.msra.mxu0 0
      %918 = vmatprep.subr.bf16.mxu0 0
      %919 = vmatpush1.bf16.msra.mxu0 0
      %920 = vmatprep.subr.bf16.mxu0 0
      %921 = vmatpush1.bf16.msra.mxu0 0
      %922 = vmatprep.subr.bf16.mxu0 0
      %923 = vmatpush1.bf16.msra.mxu0 0
      %924 = vmatprep.subr.bf16.mxu0 0
      %925 = vmatpush1.bf16.msra.mxu0 0
      %926 = vmatprep.mubr.bf16.mxu0 0
      %927 = vmatmul.mubr.bf16.gmra.mrb[0].mxu0 %v868
      %v928 = vpop.f32.mrb[0].mxu0
      %v929 = vadd.f32 0.0, %v928
      %v930 = vpop.f32.mrb[0].mxu0
      %v931 = vpop.f32.mrb[0].mxu0
      %v932 = vadd.f32 0.0, %v931
      %v933 = vpop.f32.mrb[0].mxu0
      %934 = vmatprep.mubr.bf16.mxu0 0
      %935 = vmatmul.mubr.bf16.gmra.mrb[0].mxu0 %v871
      %v936 = vpop.f32.mrb[0].mxu0
      %v937 = vadd.f32 0.0, %v936
      %v938 = vpop.f32.mrb[0].mxu0
      %v939 = vpop.f32.mrb[0].mxu0
      %v940 = vadd.f32 0.0, %v939
      %v941 = vpop.f32.mrb[0].mxu0
      %942 = vmatprep.mubr.bf16.mxu0 0
      %943 = vmatmul.mubr.bf16.gmra.mrb[0].mxu0 %v874
      %v944 = vpop.f32.mrb[0].mxu0
      %v945 = vadd.f32 0.0, %v944
      %v946 = vpop.f32.mrb[0].mxu0
      %v947 = vpop.f32.mrb[0].mxu0
      %v948 = vadd.f32 0.0, %v947
      %v949 = vpop.f32.mrb[0].mxu0
      %950 = vmatprep.mubr.bf16.mxu0 0
      %951 = vmatmul.mubr.bf16.gmra.mrb[0].mxu0 %v877
      %v952 = vpop.f32.mrb[0].mxu0
      %v953 = vadd.f32 0.0, %v952
      %v954 = vpop.f32.mrb[0].mxu0
      %v955 = vpop.f32.mrb[0].mxu0
      %v956 = vadd.f32 0.0, %v955
      %v957 = vpop.f32.mrb[0].mxu0
      %958 = vmatprep.mubr.bf16.mxu0 0
      %959 = vmatmul.mubr.bf16.gmra.mrb[0].mxu0 %v880
      %v960 = vpop.f32.mrb[0].mxu0
      %v961 = vadd.f32 0.0, %v960
      %v962 = vpop.f32.mrb[0].mxu0
      %v963 = vpop.f32.mrb[0].mxu0
      %v964 = vadd.f32 0.0, %v963
      %v965 = vpop.f32.mrb[0].mxu0
      %966 = vmatprep.mubr.bf16.mxu0 0
      %967 = vmatmul.mubr.bf16.gmra.mrb[0].mxu0 %v883
      %v968 = vpop.f32.mrb[0].mxu0
      %v969 = vadd.f32 0.0, %v968
      %v970 = vpop.f32.mrb[0].mxu0
      %v971 = vpop.f32.mrb[0].mxu0
      %v972 = vadd.f32 0.0, %v971
      %v973 = vpop.f32.mrb[0].mxu0
      %974 = vmatprep.mubr.bf16.mxu0 0
      %975 = vmatmul.mubr.bf16.gmra.mrb[0].mxu0 %v886
      %v976 = vpop.f32.mrb[0].mxu0
      %v977 = vadd.f32 0.0, %v976
      %v978 = vpop.f32.mrb[0].mxu0
      %v979 = vpop.f32.mrb[0].mxu0
      %v980 = vadd.f32 0.0, %v979
      %v981 = vpop.f32.mrb[0].mxu0
      %982 = vmatprep.mubr.bf16.mxu0 0
      %983 = vmatmul.mubr.bf16.gmra.mrb[0].mxu0 %v889
      %v984 = vpop.f32.mrb[0].mxu0
      %v985 = vadd.f32 0.0, %v984
      %v986 = vpop.f32.mrb[0].mxu0
      %v987 = vpop.f32.mrb[0].mxu0
      %v988 = vadd.f32 0.0, %v987
      %v989 = vpop.f32.mrb[0].mxu0
      %990 = vdwg.mxu0
      %v991 = vadd.f32 %v714, %v929
      %v992 = vadd.f32 %v717, %v932
      %v993 = vadd.f32 %v722, %v937
      %v994 = vadd.f32 %v725, %v940
      %v995 = vadd.f32 %v730, %v945
      %v996 = vadd.f32 %v733, %v948
      %v997 = vadd.f32 %v738, %v953
      %v998 = vadd.f32 %v741, %v956
      %v999 = vadd.f32 %v746, %v961
      %v1000 = vadd.f32 %v749, %v964
      %v1001 = vadd.f32 %v754, %v969
      %v1002 = vadd.f32 %v757, %v972
      %v1003 = vadd.f32 %v762, %v977
      %v1004 = vadd.f32 %v765, %v980
      %v1005 = vadd.f32 %v770, %v985
      %v1006 = vadd.f32 %v773, %v988
      %v1009 = vunpack.c.l.b16 %v252
      %v1010 = vunpack.c.l.b16 %v253
      %v1011 = vpack.c.b16 %v1010, %v1009
      %v1013 = vunpack.c.l.b16 %v259
      %v1014 = vpack.c.b16 %v1013, %v1013
      %v1015 = vrot.slane %v1014, 2
      %v1017 = vsel %vm486, %v1011, 0
      %v1020 = vsel %vm511, %v1015, 0
      %1022 = vmatprep.subr.bf16.mxu0 0
      %1023 = vmatpush1.bf16.msra.mxu0 %v1020
      %1024 = vmatprep.subr.bf16.mxu0 0
      %1025 = vmatpush1.bf16.msra.mxu0 0
      %1026 = vmatprep.subr.bf16.mxu0 0
      %1027 = vmatpush1.bf16.msra.mxu0 0
      %1028 = vmatprep.subr.bf16.mxu0 0
      %1029 = vmatpush1.bf16.msra.mxu0 0
      %1030 = vmatprep.subr.bf16.mxu0 0
      %1031 = vmatpush1.bf16.msra.mxu0 0
      %1032 = vmatprep.subr.bf16.mxu0 0
      %1033 = vmatpush1.bf16.msra.mxu0 0
      %1034 = vmatprep.subr.bf16.mxu0 0
      %1035 = vmatpush1.bf16.msra.mxu0 0
      %1036 = vmatprep.subr.bf16.mxu0 0
      %1037 = vmatpush1.bf16.msra.mxu0 0
      %1038 = vmatprep.subr.bf16.mxu0 0
      %1039 = vmatpush1.bf16.msra.mxu0 0
      %1040 = vmatprep.subr.bf16.mxu0 0
      %1041 = vmatpush1.bf16.msra.mxu0 0
      %1042 = vmatprep.subr.bf16.mxu0 0
      %1043 = vmatpush1.bf16.msra.mxu0 0
      %1044 = vmatprep.subr.bf16.mxu0 0
      %1045 = vmatpush1.bf16.msra.mxu0 0
      %1046 = vmatprep.subr.bf16.mxu0 0
      %1047 = vmatpush1.bf16.msra.mxu0 0
      %1048 = vmatprep.subr.bf16.mxu0 0
      %1049 = vmatpush1.bf16.msra.mxu0 0
      %1050 = vmatprep.subr.bf16.mxu0 0
      %1051 = vmatpush1.bf16.msra.mxu0 0
      %1052 = vmatprep.subr.bf16.mxu0 0
      %1053 = vmatpush1.bf16.msra.mxu0 0
      %1054 = vmatprep.mubr.bf16.mxu0 0
      %1055 = vmatmul.mubr.bf16.gmra.mrb[0].mxu0 %v656
      %v1056 = vpop.f32.mrb[0].mxu0
      %v1057 = vadd.f32 0.0, %v1056
      %v1058 = vpop.f32.mrb[0].mxu0
      %v1059 = vpop.f32.mrb[0].mxu0
      %v1060 = vadd.f32 0.0, %v1059
      %v1061 = vpop.f32.mrb[0].mxu0
      %1062 = vmatprep.mubr.bf16.mxu0 0
      %1063 = vmatmul.mubr.bf16.gmra.mrb[0].mxu0 %v659
      %v1064 = vpop.f32.mrb[0].mxu0
      %v1065 = vadd.f32 0.0, %v1064
      %v1066 = vpop.f32.mrb[0].mxu0
      %v1067 = vpop.f32.mrb[0].mxu0
      %v1068 = vadd.f32 0.0, %v1067
      %v1069 = vpop.f32.mrb[0].mxu0
      %1070 = vmatprep.mubr.bf16.mxu0 0
      %1071 = vmatmul.mubr.bf16.gmra.mrb[0].mxu0 %v662
      %v1072 = vpop.f32.mrb[0].mxu0
      %v1073 = vadd.f32 0.0, %v1072
      %v1074 = vpop.f32.mrb[0].mxu0
      %v1075 = vpop.f32.mrb[0].mxu0
      %v1076 = vadd.f32 0.0, %v1075
      %v1077 = vpop.f32.mrb[0].mxu0
      %1078 = vmatprep.mubr.bf16.mxu0 0
      %1079 = vmatmul.mubr.bf16.gmra.mrb[0].mxu0 %v665
      %v1080 = vpop.f32.mrb[0].mxu0
      %v1081 = vadd.f32 0.0, %v1080
      %v1082 = vpop.f32.mrb[0].mxu0
      %v1083 = vpop.f32.mrb[0].mxu0
      %v1084 = vadd.f32 0.0, %v1083
      %v1085 = vpop.f32.mrb[0].mxu0
      %1086 = vmatprep.mubr.bf16.mxu0 0
      %1087 = vmatmul.mubr.bf16.gmra.mrb[0].mxu0 %v668
      %v1088 = vpop.f32.mrb[0].mxu0
      %v1089 = vadd.f32 0.0, %v1088
      %v1090 = vpop.f32.mrb[0].mxu0
      %v1091 = vpop.f32.mrb[0].mxu0
      %v1092 = vadd.f32 0.0, %v1091
      %v1093 = vpop.f32.mrb[0].mxu0
      %1094 = vmatprep.mubr.bf16.mxu0 0
      %1095 = vmatmul.mubr.bf16.gmra.mrb[0].mxu0 %v671
      %v1096 = vpop.f32.mrb[0].mxu0
      %v1097 = vadd.f32 0.0, %v1096
      %v1098 = vpop.f32.mrb[0].mxu0
      %v1099 = vpop.f32.mrb[0].mxu0
      %v1100 = vadd.f32 0.0, %v1099
      %v1101 = vpop.f32.mrb[0].mxu0
      %1102 = vmatprep.mubr.bf16.mxu0 0
      %1103 = vmatmul.mubr.bf16.gmra.mrb[0].mxu0 %v674
      %v1104 = vpop.f32.mrb[0].mxu0
      %v1105 = vadd.f32 0.0, %v1104
      %v1106 = vpop.f32.mrb[0].mxu0
      %v1107 = vpop.f32.mrb[0].mxu0
      %v1108 = vadd.f32 0.0, %v1107
      %v1109 = vpop.f32.mrb[0].mxu0
      %1110 = vmatprep.mubr.bf16.mxu0 0
      %1111 = vmatmul.mubr.bf16.gmra.mrb[0].mxu0 %v1017
      %v1112 = vpop.f32.mrb[0].mxu0
      %v1113 = vadd.f32 0.0, %v1112
      %v1114 = vpop.f32.mrb[0].mxu0
      %v1115 = vpop.f32.mrb[0].mxu0
      %v1116 = vadd.f32 0.0, %v1115
      %v1117 = vpop.f32.mrb[0].mxu0
      %1118 = vdwg.mxu0
      %v1119 = vadd.f32 %v991, %v1057
      %v1120 = vadd.f32 %v992, %v1060
      %v1121 = vadd.f32 %v993, %v1065
      %v1122 = vadd.f32 %v994, %v1068
      %v1123 = vadd.f32 %v995, %v1073
      %v1124 = vadd.f32 %v996, %v1076
      %v1125 = vadd.f32 %v997, %v1081
      %v1126 = vadd.f32 %v998, %v1084
      %v1127 = vadd.f32 %v999, %v1089
      %v1128 = vadd.f32 %v1000, %v1092
      %v1129 = vadd.f32 %v1001, %v1097
      %v1130 = vadd.f32 %v1002, %v1100
      %v1131 = vadd.f32 %v1003, %v1105
      %v1132 = vadd.f32 %v1004, %v1108
      %v1133 = vadd.f32 %v1005, %v1113
      %v1134 = vadd.f32 %v1006, %v1116
      %v1136 = vshrl.u32 %v252, 16
      %v1138 = vrot.slane %v1136, 4
      %v1139 = vshll.u32 %v252, 16
      %v1141 = vrot.slane %v1139, 5
      %v1142 = vor.u32 %v1138, %v1141
      %v1143 = vrot.slane %v1142, 4
      %v1145 = vshll.u32 %v253, 16
      %v1147 = vrot.slane %v1145, 5
      %v1148 = vsel %vm265, %v1143, %v1147
      %v1149 = vshrl.u32 %v253, 16
      %v1151 = vrot.slane %v1149, 4
      %v1152 = vor.u32 %v1151, %v1147
      %v1153 = vrot.slane %v1152, 4
      %v1155 = vshll.u32 %v254, 16
      %v1157 = vrot.slane %v1155, 5
      %v1158 = vsel %vm265, %v1153, %v1157
      %v1159 = vunpack.c.l.b16 %v1148
      %v1160 = vunpack.c.l.b16 %v1158
      %v1161 = vpack.c.b16 %v1160, %v1159
      %v1163 = vsel %vm486, %v1161, 0
      %v1166 = vsel %vm511, %v260, 0
      %1168 = vmatprep.subr.bf16.mxu0 0
      %1169 = vmatpush1.bf16.msra.mxu0 %v1166
      %1170 = vmatprep.subr.bf16.mxu0 0
      %1171 = vmatpush1.bf16.msra.mxu0 0
      %1172 = vmatprep.subr.bf16.mxu0 0
      %1173 = vmatpush1.bf16.msra.mxu0 0
      %1174 = vmatprep.subr.bf16.mxu0 0
      %1175 = vmatpush1.bf16.msra.mxu0 0
      %1176 = vmatprep.subr.bf16.mxu0 0
      %1177 = vmatpush1.bf16.msra.mxu0 0
      %1178 = vmatprep.subr.bf16.mxu0 0
      %1179 = vmatpush1.bf16.msra.mxu0 0
      %1180 = vmatprep.subr.bf16.mxu0 0
      %1181 = vmatpush1.bf16.msra.mxu0 0
      %1182 = vmatprep.subr.bf16.mxu0 0
      %1183 = vmatpush1.bf16.msra.mxu0 0
      %1184 = vmatprep.subr.bf16.mxu0 0
      %1185 = vmatpush1.bf16.msra.mxu0 0
      %1186 = vmatprep.subr.bf16.mxu0 0
      %1187 = vmatpush1.bf16.msra.mxu0 0
      %1188 = vmatprep.subr.bf16.mxu0 0
      %1189 = vmatpush1.bf16.msra.mxu0 0
      %1190 = vmatprep.subr.bf16.mxu0 0
      %1191 = vmatpush1.bf16.msra.mxu0 0
      %1192 = vmatprep.subr.bf16.mxu0 0
      %1193 = vmatpush1.bf16.msra.mxu0 0
      %1194 = vmatprep.subr.bf16.mxu0 0
      %1195 = vmatpush1.bf16.msra.mxu0 0
      %1196 = vmatprep.subr.bf16.mxu0 0
      %1197 = vmatpush1.bf16.msra.mxu0 0
      %1198 = vmatprep.subr.bf16.mxu0 0
      %1199 = vmatpush1.bf16.msra.mxu0 0
      %1200 = vmatprep.mubr.bf16.mxu0 0
      %1201 = vmatmul.mubr.bf16.gmra.mrb[0].mxu0 %v491
      %v1202 = vpop.f32.mrb[0].mxu0
      %v1203 = vadd.f32 0.0, %v1202
      %v1204 = vpop.f32.mrb[0].mxu0
      %v1205 = vpop.f32.mrb[0].mxu0
      %v1206 = vadd.f32 0.0, %v1205
      %v1207 = vpop.f32.mrb[0].mxu0
      %1208 = vmatprep.mubr.bf16.mxu0 0
      %1209 = vmatmul.mubr.bf16.gmra.mrb[0].mxu0 %v494
      %v1210 = vpop.f32.mrb[0].mxu0
      %v1211 = vadd.f32 0.0, %v1210
      %v1212 = vpop.f32.mrb[0].mxu0
      %v1213 = vpop.f32.mrb[0].mxu0
      %v1214 = vadd.f32 0.0, %v1213
      %v1215 = vpop.f32.mrb[0].mxu0
      %1216 = vmatprep.mubr.bf16.mxu0 0
      %1217 = vmatmul.mubr.bf16.gmra.mrb[0].mxu0 %v497
      %v1218 = vpop.f32.mrb[0].mxu0
      %v1219 = vadd.f32 0.0, %v1218
      %v1220 = vpop.f32.mrb[0].mxu0
      %v1221 = vpop.f32.mrb[0].mxu0
      %v1222 = vadd.f32 0.0, %v1221
      %v1223 = vpop.f32.mrb[0].mxu0
      %1224 = vmatprep.mubr.bf16.mxu0 0
      %1225 = vmatmul.mubr.bf16.gmra.mrb[0].mxu0 %v500
      %v1226 = vpop.f32.mrb[0].mxu0
      %v1227 = vadd.f32 0.0, %v1226
      %v1228 = vpop.f32.mrb[0].mxu0
      %v1229 = vpop.f32.mrb[0].mxu0
      %v1230 = vadd.f32 0.0, %v1229
      %v1231 = vpop.f32.mrb[0].mxu0
      %1232 = vmatprep.mubr.bf16.mxu0 0
      %1233 = vmatmul.mubr.bf16.gmra.mrb[0].mxu0 %v503
      %v1234 = vpop.f32.mrb[0].mxu0
      %v1235 = vadd.f32 0.0, %v1234
      %v1236 = vpop.f32.mrb[0].mxu0
      %v1237 = vpop.f32.mrb[0].mxu0
      %v1238 = vadd.f32 0.0, %v1237
      %v1239 = vpop.f32.mrb[0].mxu0
      %1240 = vmatprep.mubr.bf16.mxu0 0
      %1241 = vmatmul.mubr.bf16.gmra.mrb[0].mxu0 %v506
      %v1242 = vpop.f32.mrb[0].mxu0
      %v1243 = vadd.f32 0.0, %v1242
      %v1244 = vpop.f32.mrb[0].mxu0
      %v1245 = vpop.f32.mrb[0].mxu0
      %v1246 = vadd.f32 0.0, %v1245
      %v1247 = vpop.f32.mrb[0].mxu0
      %1248 = vmatprep.mubr.bf16.mxu0 0
      %1249 = vmatmul.mubr.bf16.gmra.mrb[0].mxu0 %v509
      %v1250 = vpop.f32.mrb[0].mxu0
      %v1251 = vadd.f32 0.0, %v1250
      %v1252 = vpop.f32.mrb[0].mxu0
      %v1253 = vpop.f32.mrb[0].mxu0
      %v1254 = vadd.f32 0.0, %v1253
      %v1255 = vpop.f32.mrb[0].mxu0
      %1256 = vmatprep.mubr.bf16.mxu0 0
      %1257 = vmatmul.mubr.bf16.gmra.mrb[0].mxu0 %v1163
      %v1258 = vpop.f32.mrb[0].mxu0
      %v1259 = vadd.f32 0.0, %v1258
      %v1260 = vpop.f32.mrb[0].mxu0
      %v1261 = vpop.f32.mrb[0].mxu0
      %v1262 = vadd.f32 0.0, %v1261
      %v1263 = vpop.f32.mrb[0].mxu0
      %1264 = vdwg.mxu0
      %v1265 = vadd.f32 %v1119, %v1203
      %v1266 = vadd.f32 %v1120, %v1206
      %v1267 = vadd.f32 %v1121, %v1211
      %v1268 = vadd.f32 %v1122, %v1214
      %v1269 = vadd.f32 %v1123, %v1219
      %v1270 = vadd.f32 %v1124, %v1222
      %v1271 = vadd.f32 %v1125, %v1227
      %v1272 = vadd.f32 %v1126, %v1230
      %v1273 = vadd.f32 %v1127, %v1235
      %v1274 = vadd.f32 %v1128, %v1238
      %v1275 = vadd.f32 %v1129, %v1243
      %v1276 = vadd.f32 %v1130, %v1246
      %v1277 = vadd.f32 %v1131, %v1251
      %v1278 = vadd.f32 %v1132, %v1254
      %v1279 = vadd.f32 %v1133, %v1259
      %v1280 = vadd.f32 %v1134, %v1262
      %v1282 = vrot.slane %v252, 5
      %v1283 = vrot.slane %v1282, 4
      %v1284 = vrot.slane %v253, 5
      %v1285 = vsel %vm786, %v1283, %v1284
      %v1286 = vrot.slane %v1284, 4
      %v1287 = vrot.slane %v254, 5
      %v1288 = vsel %vm786, %v1286, %v1287
      %v1289 = vunpack.c.l.b16 %v1285
      %v1290 = vunpack.c.l.b16 %v1288
      %v1291 = vpack.c.b16 %v1290, %v1289
      %v1293 = vunpack.c.l.b16 %v260
      %v1294 = vpack.c.b16 %v1293, %v1293
      %v1295 = vrot.slane %v1294, 2
      %v1297 = vsel %vm486, %v1291, 0
      %v1300 = vsel %vm511, %v1295, 0
      %1302 = vmatprep.subr.bf16.mxu0 0
      %1303 = vmatpush1.bf16.msra.mxu0 %v1300
      %1304 = vmatprep.subr.bf16.mxu0 0
      %1305 = vmatpush1.bf16.msra.mxu0 0
      %1306 = vmatprep.subr.bf16.mxu0 0
      %1307 = vmatpush1.bf16.msra.mxu0 0
      %1308 = vmatprep.subr.bf16.mxu0 0
      %1309 = vmatpush1.bf16.msra.mxu0 0
      %1310 = vmatprep.subr.bf16.mxu0 0
      %1311 = vmatpush1.bf16.msra.mxu0 0
      %1312 = vmatprep.subr.bf16.mxu0 0
      %1313 = vmatpush1.bf16.msra.mxu0 0
      %1314 = vmatprep.subr.bf16.mxu0 0
      %1315 = vmatpush1.bf16.msra.mxu0 0
      %1316 = vmatprep.subr.bf16.mxu0 0
      %1317 = vmatpush1.bf16.msra.mxu0 0
      %1318 = vmatprep.subr.bf16.mxu0 0
      %1319 = vmatpush1.bf16.msra.mxu0 0
      %1320 = vmatprep.subr.bf16.mxu0 0
      %1321 = vmatpush1.bf16.msra.mxu0 0
      %1322 = vmatprep.subr.bf16.mxu0 0
      %1323 = vmatpush1.bf16.msra.mxu0 0
      %1324 = vmatprep.subr.bf16.mxu0 0
      %1325 = vmatpush1.bf16.msra.mxu0 0
      %1326 = vmatprep.subr.bf16.mxu0 0
      %1327 = vmatpush1.bf16.msra.mxu0 0
      %1328 = vmatprep.subr.bf16.mxu0 0
      %1329 = vmatpush1.bf16.msra.mxu0 0
      %1330 = vmatprep.subr.bf16.mxu0 0
      %1331 = vmatpush1.bf16.msra.mxu0 0
      %1332 = vmatprep.subr.bf16.mxu0 0
      %1333 = vmatpush1.bf16.msra.mxu0 0
      %1334 = vmatprep.mubr.bf16.mxu0 0
      %1335 = vmatmul.mubr.bf16.gmra.mrb[0].mxu0 %v871
      %v1336 = vpop.f32.mrb[0].mxu0
      %v1337 = vadd.f32 0.0, %v1336
      %v1338 = vpop.f32.mrb[0].mxu0
      %v1339 = vpop.f32.mrb[0].mxu0
      %v1340 = vadd.f32 0.0, %v1339
      %v1341 = vpop.f32.mrb[0].mxu0
      %1342 = vmatprep.mubr.bf16.mxu0 0
      %1343 = vmatmul.mubr.bf16.gmra.mrb[0].mxu0 %v874
      %v1344 = vpop.f32.mrb[0].mxu0
      %v1345 = vadd.f32 0.0, %v1344
      %v1346 = vpop.f32.mrb[0].mxu0
      %v1347 = vpop.f32.mrb[0].mxu0
      %v1348 = vadd.f32 0.0, %v1347
      %v1349 = vpop.f32.mrb[0].mxu0
      %1350 = vmatprep.mubr.bf16.mxu0 0
      %1351 = vmatmul.mubr.bf16.gmra.mrb[0].mxu0 %v877
      %v1352 = vpop.f32.mrb[0].mxu0
      %v1353 = vadd.f32 0.0, %v1352
      %v1354 = vpop.f32.mrb[0].mxu0
      %v1355 = vpop.f32.mrb[0].mxu0
      %v1356 = vadd.f32 0.0, %v1355
      %v1357 = vpop.f32.mrb[0].mxu0
      %1358 = vmatprep.mubr.bf16.mxu0 0
      %1359 = vmatmul.mubr.bf16.gmra.mrb[0].mxu0 %v880
      %v1360 = vpop.f32.mrb[0].mxu0
      %v1361 = vadd.f32 0.0, %v1360
      %v1362 = vpop.f32.mrb[0].mxu0
      %v1363 = vpop.f32.mrb[0].mxu0
      %v1364 = vadd.f32 0.0, %v1363
      %v1365 = vpop.f32.mrb[0].mxu0
      %1366 = vmatprep.mubr.bf16.mxu0 0
      %1367 = vmatmul.mubr.bf16.gmra.mrb[0].mxu0 %v883
      %v1368 = vpop.f32.mrb[0].mxu0
      %v1369 = vadd.f32 0.0, %v1368
      %v1370 = vpop.f32.mrb[0].mxu0
      %v1371 = vpop.f32.mrb[0].mxu0
      %v1372 = vadd.f32 0.0, %v1371
      %v1373 = vpop.f32.mrb[0].mxu0
      %1374 = vmatprep.mubr.bf16.mxu0 0
      %1375 = vmatmul.mubr.bf16.gmra.mrb[0].mxu0 %v886
      %v1376 = vpop.f32.mrb[0].mxu0
      %v1377 = vadd.f32 0.0, %v1376
      %v1378 = vpop.f32.mrb[0].mxu0
      %v1379 = vpop.f32.mrb[0].mxu0
      %v1380 = vadd.f32 0.0, %v1379
      %v1381 = vpop.f32.mrb[0].mxu0
      %1382 = vmatprep.mubr.bf16.mxu0 0
      %1383 = vmatmul.mubr.bf16.gmra.mrb[0].mxu0 %v889
      %v1384 = vpop.f32.mrb[0].mxu0
      %v1385 = vadd.f32 0.0, %v1384
      %v1386 = vpop.f32.mrb[0].mxu0
      %v1387 = vpop.f32.mrb[0].mxu0
      %v1388 = vadd.f32 0.0, %v1387
      %v1389 = vpop.f32.mrb[0].mxu0
      %1390 = vmatprep.mubr.bf16.mxu0 0
      %1391 = vmatmul.mubr.bf16.gmra.mrb[0].mxu0 %v1297
      %v1392 = vpop.f32.mrb[0].mxu0
      %v1393 = vadd.f32 0.0, %v1392
      %v1394 = vpop.f32.mrb[0].mxu0
      %v1395 = vpop.f32.mrb[0].mxu0
      %v1396 = vadd.f32 0.0, %v1395
      %v1397 = vpop.f32.mrb[0].mxu0
      %1398 = vdwg.mxu0
      %v1399 = vadd.f32 %v1265, %v1337
      %v1400 = vadd.f32 %v1266, %v1340
      %v1401 = vadd.f32 %v1267, %v1345
      %v1402 = vadd.f32 %v1268, %v1348
      %v1403 = vadd.f32 %v1269, %v1353
      %v1404 = vadd.f32 %v1270, %v1356
      %v1405 = vadd.f32 %v1271, %v1361
      %v1406 = vadd.f32 %v1272, %v1364
      %v1407 = vadd.f32 %v1273, %v1369
      %v1408 = vadd.f32 %v1274, %v1372
      %v1409 = vadd.f32 %v1275, %v1377
      %v1410 = vadd.f32 %v1276, %v1380
      %v1411 = vadd.f32 %v1277, %v1385
      %v1412 = vadd.f32 %v1278, %v1388
      %v1413 = vadd.f32 %v1279, %v1393
      %v1414 = vadd.f32 %v1280, %v1396
      %v1417 = vunpack.c.l.b16 %v255
      %v1418 = vunpack.c.l.b16 %v256
      %v1419 = vpack.c.b16 %v1418, %v1417
      %v1421 = vsel %vm486, %v1419, 0
      %v1424 = vsel %vm511, %v261, 0
      %1426 = vmatprep.subr.bf16.mxu0 0
      %1427 = vmatpush1.bf16.msra.mxu0 %v1424
      %1428 = vmatprep.subr.bf16.mxu0 0
      %1429 = vmatpush1.bf16.msra.mxu0 0
      %1430 = vmatprep.subr.bf16.mxu0 0
      %1431 = vmatpush1.bf16.msra.mxu0 0
      %1432 = vmatprep.subr.bf16.mxu0 0
      %1433 = vmatpush1.bf16.msra.mxu0 0
      %1434 = vmatprep.subr.bf16.mxu0 0
      %1435 = vmatpush1.bf16.msra.mxu0 0
      %1436 = vmatprep.subr.bf16.mxu0 0
      %1437 = vmatpush1.bf16.msra.mxu0 0
      %1438 = vmatprep.subr.bf16.mxu0 0
      %1439 = vmatpush1.bf16.msra.mxu0 0
      %1440 = vmatprep.subr.bf16.mxu0 0
      %1441 = vmatpush1.bf16.msra.mxu0 0
      %1442 = vmatprep.subr.bf16.mxu0 0
      %1443 = vmatpush1.bf16.msra.mxu0 0
      %1444 = vmatprep.subr.bf16.mxu0 0
      %1445 = vmatpush1.bf16.msra.mxu0 0
      %1446 = vmatprep.subr.bf16.mxu0 0
      %1447 = vmatpush1.bf16.msra.mxu0 0
      %1448 = vmatprep.subr.bf16.mxu0 0
      %1449 = vmatpush1.bf16.msra.mxu0 0
      %1450 = vmatprep.subr.bf16.mxu0 0
      %1451 = vmatpush1.bf16.msra.mxu0 0
      %1452 = vmatprep.subr.bf16.mxu0 0
      %1453 = vmatpush1.bf16.msra.mxu0 0
      %1454 = vmatprep.subr.bf16.mxu0 0
      %1455 = vmatpush1.bf16.msra.mxu0 0
      %1456 = vmatprep.subr.bf16.mxu0 0
      %1457 = vmatpush1.bf16.msra.mxu0 0
      %1458 = vmatprep.mubr.bf16.mxu0 0
      %1459 = vmatmul.mubr.bf16.gmra.mrb[0].mxu0 %v659
      %v1460 = vpop.f32.mrb[0].mxu0
      %v1461 = vadd.f32 0.0, %v1460
      %v1462 = vpop.f32.mrb[0].mxu0
      %v1463 = vpop.f32.mrb[0].mxu0
      %v1464 = vadd.f32 0.0, %v1463
      %v1465 = vpop.f32.mrb[0].mxu0
      %1466 = vmatprep.mubr.bf16.mxu0 0
      %1467 = vmatmul.mubr.bf16.gmra.mrb[0].mxu0 %v662
      %v1468 = vpop.f32.mrb[0].mxu0
      %v1469 = vadd.f32 0.0, %v1468
      %v1470 = vpop.f32.mrb[0].mxu0
      %v1471 = vpop.f32.mrb[0].mxu0
      %v1472 = vadd.f32 0.0, %v1471
      %v1473 = vpop.f32.mrb[0].mxu0
      %1474 = vmatprep.mubr.bf16.mxu0 0
      %1475 = vmatmul.mubr.bf16.gmra.mrb[0].mxu0 %v665
      %v1476 = vpop.f32.mrb[0].mxu0
      %v1477 = vadd.f32 0.0, %v1476
      %v1478 = vpop.f32.mrb[0].mxu0
      %v1479 = vpop.f32.mrb[0].mxu0
      %v1480 = vadd.f32 0.0, %v1479
      %v1481 = vpop.f32.mrb[0].mxu0
      %1482 = vmatprep.mubr.bf16.mxu0 0
      %1483 = vmatmul.mubr.bf16.gmra.mrb[0].mxu0 %v668
      %v1484 = vpop.f32.mrb[0].mxu0
      %v1485 = vadd.f32 0.0, %v1484
      %v1486 = vpop.f32.mrb[0].mxu0
      %v1487 = vpop.f32.mrb[0].mxu0
      %v1488 = vadd.f32 0.0, %v1487
      %v1489 = vpop.f32.mrb[0].mxu0
      %1490 = vmatprep.mubr.bf16.mxu0 0
      %1491 = vmatmul.mubr.bf16.gmra.mrb[0].mxu0 %v671
      %v1492 = vpop.f32.mrb[0].mxu0
      %v1493 = vadd.f32 0.0, %v1492
      %v1494 = vpop.f32.mrb[0].mxu0
      %v1495 = vpop.f32.mrb[0].mxu0
      %v1496 = vadd.f32 0.0, %v1495
      %v1497 = vpop.f32.mrb[0].mxu0
      %1498 = vmatprep.mubr.bf16.mxu0 0
      %1499 = vmatmul.mubr.bf16.gmra.mrb[0].mxu0 %v674
      %v1500 = vpop.f32.mrb[0].mxu0
      %v1501 = vadd.f32 0.0, %v1500
      %v1502 = vpop.f32.mrb[0].mxu0
      %v1503 = vpop.f32.mrb[0].mxu0
      %v1504 = vadd.f32 0.0, %v1503
      %v1505 = vpop.f32.mrb[0].mxu0
      %1506 = vmatprep.mubr.bf16.mxu0 0
      %1507 = vmatmul.mubr.bf16.gmra.mrb[0].mxu0 %v1017
      %v1508 = vpop.f32.mrb[0].mxu0
      %v1509 = vadd.f32 0.0, %v1508
      %v1510 = vpop.f32.mrb[0].mxu0
      %v1511 = vpop.f32.mrb[0].mxu0
      %v1512 = vadd.f32 0.0, %v1511
      %v1513 = vpop.f32.mrb[0].mxu0
      %1514 = vmatprep.mubr.bf16.mxu0 0
      %1515 = vmatmul.mubr.bf16.gmra.mrb[0].mxu0 %v1421
      %v1516 = vpop.f32.mrb[0].mxu0
      %v1517 = vadd.f32 0.0, %v1516
      %v1518 = vpop.f32.mrb[0].mxu0
      %v1519 = vpop.f32.mrb[0].mxu0
      %v1520 = vadd.f32 0.0, %v1519
      %v1521 = vpop.f32.mrb[0].mxu0
      %1522 = vdwg.mxu0
      %v1523 = vadd.f32 %v1399, %v1461
      %v1524 = vadd.f32 %v1400, %v1464
      %v1525 = vadd.f32 %v1401, %v1469
      %v1526 = vadd.f32 %v1402, %v1472
      %v1527 = vadd.f32 %v1403, %v1477
      %v1528 = vadd.f32 %v1404, %v1480
      %v1529 = vadd.f32 %v1405, %v1485
      %v1530 = vadd.f32 %v1406, %v1488
      %v1531 = vadd.f32 %v1407, %v1493
      %v1532 = vadd.f32 %v1408, %v1496
      %v1533 = vadd.f32 %v1409, %v1501
      %v1534 = vadd.f32 %v1410, %v1504
      %v1535 = vadd.f32 %v1411, %v1509
      %v1536 = vadd.f32 %v1412, %v1512
      %v1537 = vadd.f32 %v1413, %v1517
      %v1538 = vadd.f32 %v1414, %v1520
      %v1540 = vshrl.u32 %v255, 16
      %v1542 = vrot.slane %v1540, 4
      %v1543 = vshll.u32 %v255, 16
      %v1545 = vrot.slane %v1543, 5
      %v1546 = vor.u32 %v1542, %v1545
      %v1547 = vrot.slane %v1546, 4
      %v1549 = vshll.u32 %v256, 16
      %v1551 = vrot.slane %v1549, 5
      %v1552 = vsel %vm265, %v1547, %v1551
      %v1553 = vshrl.u32 %v256, 16
      %v1555 = vrot.slane %v1553, 4
      %v1556 = vor.u32 %v1555, %v1551
      %v1557 = vrot.slane %v1556, 4
      %v1559 = vshll.u32 %v257, 16
      %v1561 = vrot.slane %v1559, 5
      %v1562 = vsel %vm265, %v1557, %v1561
      %v1563 = vunpack.c.l.b16 %v1552
      %v1564 = vunpack.c.l.b16 %v1562
      %v1565 = vpack.c.b16 %v1564, %v1563
      %v1567 = vunpack.c.l.b16 %v261
      %v1568 = vpack.c.b16 %v1567, %v1567
      %v1569 = vrot.slane %v1568, 2
      %v1571 = vsel %vm486, %v1565, 0
      %v1574 = vsel %vm511, %v1569, 0
      %1576 = vmatprep.subr.bf16.mxu0 0
      %1577 = vmatpush1.bf16.msra.mxu0 %v1574
      %1578 = vmatprep.subr.bf16.mxu0 0
      %1579 = vmatpush1.bf16.msra.mxu0 0
      %1580 = vmatprep.subr.bf16.mxu0 0
      %1581 = vmatpush1.bf16.msra.mxu0 0
      %1582 = vmatprep.subr.bf16.mxu0 0
      %1583 = vmatpush1.bf16.msra.mxu0 0
      %1584 = vmatprep.subr.bf16.mxu0 0
      %1585 = vmatpush1.bf16.msra.mxu0 0
      %1586 = vmatprep.subr.bf16.mxu0 0
      %1587 = vmatpush1.bf16.msra.mxu0 0
      %1588 = vmatprep.subr.bf16.mxu0 0
      %1589 = vmatpush1.bf16.msra.mxu0 0
      %1590 = vmatprep.subr.bf16.mxu0 0
      %1591 = vmatpush1.bf16.msra.mxu0 0
      %1592 = vmatprep.subr.bf16.mxu0 0
      %1593 = vmatpush1.bf16.msra.mxu0 0
      %1594 = vmatprep.subr.bf16.mxu0 0
      %1595 = vmatpush1.bf16.msra.mxu0 0
      %1596 = vmatprep.subr.bf16.mxu0 0
      %1597 = vmatpush1.bf16.msra.mxu0 0
      %1598 = vmatprep.subr.bf16.mxu0 0
      %1599 = vmatpush1.bf16.msra.mxu0 0
      %1600 = vmatprep.subr.bf16.mxu0 0
      %1601 = vmatpush1.bf16.msra.mxu0 0
      %1602 = vmatprep.subr.bf16.mxu0 0
      %1603 = vmatpush1.bf16.msra.mxu0 0
      %1604 = vmatprep.subr.bf16.mxu0 0
      %1605 = vmatpush1.bf16.msra.mxu0 0
      %1606 = vmatprep.subr.bf16.mxu0 0
      %1607 = vmatpush1.bf16.msra.mxu0 0
      %1608 = vmatprep.mubr.bf16.mxu0 0
      %1609 = vmatmul.mubr.bf16.gmra.mrb[0].mxu0 %v494
      %v1610 = vpop.f32.mrb[0].mxu0
      %v1611 = vadd.f32 0.0, %v1610
      %v1612 = vpop.f32.mrb[0].mxu0
      %v1613 = vpop.f32.mrb[0].mxu0
      %v1614 = vadd.f32 0.0, %v1613
      %v1615 = vpop.f32.mrb[0].mxu0
      %1616 = vmatprep.mubr.bf16.mxu0 0
      %1617 = vmatmul.mubr.bf16.gmra.mrb[0].mxu0 %v497
      %v1618 = vpop.f32.mrb[0].mxu0
      %v1619 = vadd.f32 0.0, %v1618
      %v1620 = vpop.f32.mrb[0].mxu0
      %v1621 = vpop.f32.mrb[0].mxu0
      %v1622 = vadd.f32 0.0, %v1621
      %v1623 = vpop.f32.mrb[0].mxu0
      %1624 = vmatprep.mubr.bf16.mxu0 0
      %1625 = vmatmul.mubr.bf16.gmra.mrb[0].mxu0 %v500
      %v1626 = vpop.f32.mrb[0].mxu0
      %v1627 = vadd.f32 0.0, %v1626
      %v1628 = vpop.f32.mrb[0].mxu0
      %v1629 = vpop.f32.mrb[0].mxu0
      %v1630 = vadd.f32 0.0, %v1629
      %v1631 = vpop.f32.mrb[0].mxu0
      %1632 = vmatprep.mubr.bf16.mxu0 0
      %1633 = vmatmul.mubr.bf16.gmra.mrb[0].mxu0 %v503
      %v1634 = vpop.f32.mrb[0].mxu0
      %v1635 = vadd.f32 0.0, %v1634
      %v1636 = vpop.f32.mrb[0].mxu0
      %v1637 = vpop.f32.mrb[0].mxu0
      %v1638 = vadd.f32 0.0, %v1637
      %v1639 = vpop.f32.mrb[0].mxu0
      %1640 = vmatprep.mubr.bf16.mxu0 0
      %1641 = vmatmul.mubr.bf16.gmra.mrb[0].mxu0 %v506
      %v1642 = vpop.f32.mrb[0].mxu0
      %v1643 = vadd.f32 0.0, %v1642
      %v1644 = vpop.f32.mrb[0].mxu0
      %v1645 = vpop.f32.mrb[0].mxu0
      %v1646 = vadd.f32 0.0, %v1645
      %v1647 = vpop.f32.mrb[0].mxu0
      %1648 = vmatprep.mubr.bf16.mxu0 0
      %1649 = vmatmul.mubr.bf16.gmra.mrb[0].mxu0 %v509
      %v1650 = vpop.f32.mrb[0].mxu0
      %v1651 = vadd.f32 0.0, %v1650
      %v1652 = vpop.f32.mrb[0].mxu0
      %v1653 = vpop.f32.mrb[0].mxu0
      %v1654 = vadd.f32 0.0, %v1653
      %v1655 = vpop.f32.mrb[0].mxu0
      %1656 = vmatprep.mubr.bf16.mxu0 0
      %1657 = vmatmul.mubr.bf16.gmra.mrb[0].mxu0 %v1163
      %v1658 = vpop.f32.mrb[0].mxu0
      %v1659 = vadd.f32 0.0, %v1658
      %v1660 = vpop.f32.mrb[0].mxu0
      %v1661 = vpop.f32.mrb[0].mxu0
      %v1662 = vadd.f32 0.0, %v1661
      %v1663 = vpop.f32.mrb[0].mxu0
      %1664 = vmatprep.mubr.bf16.mxu0 0
      %1665 = vmatmul.mubr.bf16.gmra.mrb[0].mxu0 %v1571
      %v1666 = vpop.f32.mrb[0].mxu0
      %v1667 = vadd.f32 0.0, %v1666
      %v1668 = vpop.f32.mrb[0].mxu0
      %v1669 = vpop.f32.mrb[0].mxu0
      %v1670 = vadd.f32 0.0, %v1669
      %v1671 = vpop.f32.mrb[0].mxu0
      %1672 = vdwg.mxu0
      %v1673 = vadd.f32 %v1523, %v1611
      %v1674 = vadd.f32 %v1524, %v1614
      %v1675 = vadd.f32 %v1525, %v1619
      %v1676 = vadd.f32 %v1526, %v1622
      %v1677 = vadd.f32 %v1527, %v1627
      %v1678 = vadd.f32 %v1528, %v1630
      %v1679 = vadd.f32 %v1529, %v1635
      %v1680 = vadd.f32 %v1530, %v1638
      %v1681 = vadd.f32 %v1531, %v1643
      %v1682 = vadd.f32 %v1532, %v1646
      %v1683 = vadd.f32 %v1533, %v1651
      %v1684 = vadd.f32 %v1534, %v1654
      %v1685 = vadd.f32 %v1535, %v1659
      %v1686 = vadd.f32 %v1536, %v1662
      %v1687 = vadd.f32 %v1537, %v1667
      %v1688 = vadd.f32 %v1538, %v1670
      %v1690 = vrot.slane %v255, 5
      %v1691 = vrot.slane %v1690, 4
      %v1692 = vrot.slane %v256, 5
      %v1693 = vsel %vm786, %v1691, %v1692
      %v1694 = vrot.slane %v1692, 4
      %v1695 = vrot.slane %v257, 5
      %v1696 = vsel %vm786, %v1694, %v1695
      %v1697 = vunpack.c.l.b16 %v1693
      %v1698 = vunpack.c.l.b16 %v1696
      %v1699 = vpack.c.b16 %v1698, %v1697
      %v1701 = vsel %vm486, %v1699, 0
      %v1704 = vsel %vm511, %v262, 0
      %1706 = vmatprep.subr.bf16.mxu0 0
      %1707 = vmatpush1.bf16.msra.mxu0 %v1704
      %1708 = vmatprep.subr.bf16.mxu0 0
      %1709 = vmatpush1.bf16.msra.mxu0 0
      %1710 = vmatprep.subr.bf16.mxu0 0
      %1711 = vmatpush1.bf16.msra.mxu0 0
      %1712 = vmatprep.subr.bf16.mxu0 0
      %1713 = vmatpush1.bf16.msra.mxu0 0
      %1714 = vmatprep.subr.bf16.mxu0 0
      %1715 = vmatpush1.bf16.msra.mxu0 0
      %1716 = vmatprep.subr.bf16.mxu0 0
      %1717 = vmatpush1.bf16.msra.mxu0 0
      %1718 = vmatprep.subr.bf16.mxu0 0
      %1719 = vmatpush1.bf16.msra.mxu0 0
      %1720 = vmatprep.subr.bf16.mxu0 0
      %1721 = vmatpush1.bf16.msra.mxu0 0
      %1722 = vmatprep.subr.bf16.mxu0 0
      %1723 = vmatpush1.bf16.msra.mxu0 0
      %1724 = vmatprep.subr.bf16.mxu0 0
      %1725 = vmatpush1.bf16.msra.mxu0 0
      %1726 = vmatprep.subr.bf16.mxu0 0
      %1727 = vmatpush1.bf16.msra.mxu0 0
      %1728 = vmatprep.subr.bf16.mxu0 0
      %1729 = vmatpush1.bf16.msra.mxu0 0
      %1730 = vmatprep.subr.bf16.mxu0 0
      %1731 = vmatpush1.bf16.msra.mxu0 0
      %1732 = vmatprep.subr.bf16.mxu0 0
      %1733 = vmatpush1.bf16.msra.mxu0 0
      %1734 = vmatprep.subr.bf16.mxu0 0
      %1735 = vmatpush1.bf16.msra.mxu0 0
      %1736 = vmatprep.subr.bf16.mxu0 0
      %1737 = vmatpush1.bf16.msra.mxu0 0
      %1738 = vmatprep.mubr.bf16.mxu0 0
      %1739 = vmatmul.mubr.bf16.gmra.mrb[0].mxu0 %v874
      %v1740 = vpop.f32.mrb[0].mxu0
      %v1741 = vadd.f32 0.0, %v1740
      %v1742 = vpop.f32.mrb[0].mxu0
      %v1743 = vpop.f32.mrb[0].mxu0
      %v1744 = vadd.f32 0.0, %v1743
      %v1745 = vpop.f32.mrb[0].mxu0
      %1746 = vmatprep.mubr.bf16.mxu0 0
      %1747 = vmatmul.mubr.bf16.gmra.mrb[0].mxu0 %v877
      %v1748 = vpop.f32.mrb[0].mxu0
      %v1749 = vadd.f32 0.0, %v1748
      %v1750 = vpop.f32.mrb[0].mxu0
      %v1751 = vpop.f32.mrb[0].mxu0
      %v1752 = vadd.f32 0.0, %v1751
      %v1753 = vpop.f32.mrb[0].mxu0
      %1754 = vmatprep.mubr.bf16.mxu0 0
      %1755 = vmatmul.mubr.bf16.gmra.mrb[0].mxu0 %v880
      %v1756 = vpop.f32.mrb[0].mxu0
      %v1757 = vadd.f32 0.0, %v1756
      %v1758 = vpop.f32.mrb[0].mxu0
      %v1759 = vpop.f32.mrb[0].mxu0
      %v1760 = vadd.f32 0.0, %v1759
      %v1761 = vpop.f32.mrb[0].mxu0
      %1762 = vmatprep.mubr.bf16.mxu0 0
      %1763 = vmatmul.mubr.bf16.gmra.mrb[0].mxu0 %v883
      %v1764 = vpop.f32.mrb[0].mxu0
      %v1765 = vadd.f32 0.0, %v1764
      %v1766 = vpop.f32.mrb[0].mxu0
      %v1767 = vpop.f32.mrb[0].mxu0
      %v1768 = vadd.f32 0.0, %v1767
      %v1769 = vpop.f32.mrb[0].mxu0
      %1770 = vmatprep.mubr.bf16.mxu0 0
      %1771 = vmatmul.mubr.bf16.gmra.mrb[0].mxu0 %v886
      %v1772 = vpop.f32.mrb[0].mxu0
      %v1773 = vadd.f32 0.0, %v1772
      %v1774 = vpop.f32.mrb[0].mxu0
      %v1775 = vpop.f32.mrb[0].mxu0
      %v1776 = vadd.f32 0.0, %v1775
      %v1777 = vpop.f32.mrb[0].mxu0
      %1778 = vmatprep.mubr.bf16.mxu0 0
      %1779 = vmatmul.mubr.bf16.gmra.mrb[0].mxu0 %v889
      %v1780 = vpop.f32.mrb[0].mxu0
      %v1781 = vadd.f32 0.0, %v1780
      %v1782 = vpop.f32.mrb[0].mxu0
      %v1783 = vpop.f32.mrb[0].mxu0
      %v1784 = vadd.f32 0.0, %v1783
      %v1785 = vpop.f32.mrb[0].mxu0
      %1786 = vmatprep.mubr.bf16.mxu0 0
      %1787 = vmatmul.mubr.bf16.gmra.mrb[0].mxu0 %v1297
      %v1788 = vpop.f32.mrb[0].mxu0
      %v1789 = vadd.f32 0.0, %v1788
      %v1790 = vpop.f32.mrb[0].mxu0
      %v1791 = vpop.f32.mrb[0].mxu0
      %v1792 = vadd.f32 0.0, %v1791
      %v1793 = vpop.f32.mrb[0].mxu0
      %1794 = vmatprep.mubr.bf16.mxu0 0
      %1795 = vmatmul.mubr.bf16.gmra.mrb[0].mxu0 %v1701
      %v1796 = vpop.f32.mrb[0].mxu0
      %v1797 = vadd.f32 0.0, %v1796
      %v1798 = vpop.f32.mrb[0].mxu0
      %v1799 = vpop.f32.mrb[0].mxu0
      %v1800 = vadd.f32 0.0, %v1799
      %v1801 = vpop.f32.mrb[0].mxu0
      %1802 = vdwg.mxu0
      %v1803 = vadd.f32 %v1673, %v1741
      %v1804 = vadd.f32 %v1674, %v1744
      %v1805 = vadd.f32 %v1675, %v1749
      %v1806 = vadd.f32 %v1676, %v1752
      %v1807 = vadd.f32 %v1677, %v1757
      %v1808 = vadd.f32 %v1678, %v1760
      %v1809 = vadd.f32 %v1679, %v1765
      %v1810 = vadd.f32 %v1680, %v1768
      %v1811 = vadd.f32 %v1681, %v1773
      %v1812 = vadd.f32 %v1682, %v1776
      %v1813 = vadd.f32 %v1683, %v1781
      %v1814 = vadd.f32 %v1684, %v1784
      %v1815 = vadd.f32 %v1685, %v1789
      %v1816 = vadd.f32 %v1686, %v1792
      %v1817 = vadd.f32 %v1687, %v1797
      %v1818 = vadd.f32 %v1688, %v1800
      %v1819 = vld [vmem:[%s2] sm:$0x1]
      %v1821 = vlaneseq
      %v1822 = vshrl.u32 %v1821, 7
      %v1823 = vsub.s32 0, %v1822
      %v1824 = vrot.slane %v1819, %v1823
      %v1826 = vmul.f32 %v1803, %v1824
      %v1827 = vmul.f32 %v1804, %v1824
      %v1828 = vmul.f32 %v1805, %v1824
      %v1829 = vmul.f32 %v1806, %v1824
      %v1830 = vmul.f32 %v1807, %v1824
      %v1831 = vmul.f32 %v1808, %v1824
      %v1832 = vmul.f32 %v1809, %v1824
      %v1833 = vmul.f32 %v1810, %v1824
      %v1834 = vmul.f32 %v1811, %v1824
      %v1835 = vmul.f32 %v1812, %v1824
      %v1836 = vmul.f32 %v1813, %v1824
      %v1837 = vmul.f32 %v1814, %v1824
      %v1838 = vmul.f32 %v1815, %v1824
      %v1839 = vmul.f32 %v1816, %v1824
      %v1840 = vmul.f32 %v1817, %v1824
      %v1841 = vmul.f32 %v1818, %v1824
      %v1842 = vld [vmem:[%s3] sm:$0x1]
      %v1844 = vlaneseq
      %v1845 = vshrl.u32 %v1844, 7
      %v1846 = vsub.s32 0, %v1845
      %v1847 = vrot.slane %v1842, %v1846
      %v1849 = vadd.f32 %v1826, %v1847
      %v1850 = vadd.f32 %v1827, %v1847
      %v1851 = vadd.f32 %v1828, %v1847
      %v1852 = vadd.f32 %v1829, %v1847
      %v1853 = vadd.f32 %v1830, %v1847
      %v1854 = vadd.f32 %v1831, %v1847
      %v1855 = vadd.f32 %v1832, %v1847
      %v1856 = vadd.f32 %v1833, %v1847
      %v1857 = vadd.f32 %v1834, %v1847
      %v1858 = vadd.f32 %v1835, %v1847
      %v1859 = vadd.f32 %v1836, %v1847
      %v1860 = vadd.f32 %v1837, %v1847
      %v1861 = vadd.f32 %v1838, %v1847
      %v1862 = vadd.f32 %v1839, %v1847
      %v1863 = vadd.f32 %v1840, %v1847
      %v1864 = vadd.f32 %v1841, %v1847
      %v1865 = vmax.f32 %v1849, 0.0
      %v1866 = vmax.f32 %v1850, 0.0
      %v1867 = vmax.f32 %v1851, 0.0
      %v1868 = vmax.f32 %v1852, 0.0
      %v1869 = vmax.f32 %v1853, 0.0
      %v1870 = vmax.f32 %v1854, 0.0
      %v1871 = vmax.f32 %v1855, 0.0
      %v1872 = vmax.f32 %v1856, 0.0
      %v1873 = vmax.f32 %v1857, 0.0
      %v1874 = vmax.f32 %v1858, 0.0
      %v1875 = vmax.f32 %v1859, 0.0
      %v1876 = vmax.f32 %v1860, 0.0
      %v1877 = vmax.f32 %v1861, 0.0
      %v1878 = vmax.f32 %v1862, 0.0
      %v1879 = vmax.f32 %v1863, 0.0
      %v1880 = vmax.f32 %v1864, 0.0
      %vm1881 = vcmask 130048
      %1882 = vst.msk [vmem:[%s221] sm:$0xff] %vm1881, %v1865
      %1883 = vst.msk [vmem:[%s221 + $0x8] sm:$0xff] %vm1881, %v1866
      %1884 = vst.msk [vmem:[%s221 + $0x10] sm:$0xff] %vm1881, %v1867
      %1885 = vst.msk [vmem:[%s221 + $0x18] sm:$0xff] %vm1881, %v1868
      %1886 = vst.msk [vmem:[%s221 + $0x20] sm:$0xff] %vm1881, %v1869
      %1887 = vst.msk [vmem:[%s221 + $0x28] sm:$0xff] %vm1881, %v1870
      %1888 = vst.msk [vmem:[%s221 + $0x30] sm:$0xff] %vm1881, %v1871
      %1889 = vst.msk [vmem:[%s221 + $0x38] sm:$0xff] %vm1881, %v1872
      %1890 = vst.msk [vmem:[%s221 + $0x40] sm:$0xff] %vm1881, %v1873
      %1891 = vst.msk [vmem:[%s221 + $0x48] sm:$0xff] %vm1881, %v1874
      %1892 = vst.msk [vmem:[%s221 + $0x50] sm:$0xff] %vm1881, %v1875
      %1893 = vst.msk [vmem:[%s221 + $0x58] sm:$0xff] %vm1881, %v1876
      %1894 = vst.msk [vmem:[%s221 + $0x60] sm:$0xff] %vm1881, %v1877
      %1895 = vst.msk [vmem:[%s221 + $0x68] sm:$0xff] %vm1881, %v1878
      %1896 = vst.msk [vmem:[%s221 + $0x70] sm:$0xff] %vm1881, %v1879
      %1897 = vst.msk [vmem:[%s221 + $0x78] sm:$0xff] %vm1881, %v1880
      %s1898 = smul.u32 8, %s20
      %p1899 = scmp.lt.s32.totalorder %s19, 1
      %s1900 = scalar_select %p1899, %s19, 1
      %p1901 = scmp.lt.s32.totalorder %s1898, 15
      %s1902 = scalar_select %p1901, %s1898, 15
      %s1903 = smul.addr %s1902, 2
      %s1904 = smul.addr %s1900, 32
      %s1905 = sadd.s32 %s1903, %s1904
      %s1906 = smul.addr %s1905, 8
      %s1907 = scalar_lea.vmem %s4, %s1906
      // Predicated region
      $region37: #{rebnconv_forward.1} parent=35 // pred_check
        %p1908 = pneg %p136
      $region38: #{rebnconv_forward.1} parent=35 // pred_check_branch
        %1910 = sbr.rel (%p1908) target = $region40
      $region39: #{rebnconv_forward.1} parent=35 // pred_region
        %s1911 = smul.u32 8, %s20
      $region40: #{rebnconv_forward.1} parent=35 // pred_fallthru
        _
    $region36: #{rebnconv_forward.1} parent=5 // pred_fallthru
      _
    %p1912 = scmp.le.s32.totalorder 2, %s10
    // Predicated region
    $region41: #{rebnconv_forward.1} parent=5 // pred_check
      %p1913 = pneg %p1912
    $region42: #{rebnconv_forward.1} parent=5 // pred_check_branch
      %1915 = sbr.rel (%p1913) target = $region44
    $region43: #{rebnconv_forward.1} parent=5 // pred_region
      %s1916 = ssub.s32 %s10, 2
      // Predicated region
      $region45: #{rebnconv_forward.1} parent=43 // pred_check
        %p1917 = pneg %p142
      $region46: #{rebnconv_forward.1} parent=43 // pred_check_branch
        %1919 = sbr.rel (%p1917) target = $region48
      $region47: #{rebnconv_forward.1} parent=43 // pred_region
        %s1920 = smul.u32 8, %s22
        %p1921 = scmp.lt.s32.totalorder %s21, 1
        %s1922 = scalar_select %p1921, %s21, 1
        %p1923 = scmp.lt.s32.totalorder %s1920, 15
        %s1924 = scalar_select %p1923, %s1920, 15
        %s1925 = smul.addr %s1924, 2
        %s1926 = smul.addr %s1922, 32
        %s1927 = sadd.s32 %s1925, %s1926
        %s1928 = smul.addr %s1927, 8
        %s1929 = scalar_lea.vmem %s4, %s1928
      $region48: #{rebnconv_forward.1} parent=43 // pred_fallthru
        _
    $region44: #{rebnconv_forward.1} parent=5 // pred_fallthru
      _
  $region6: #{rebnconv_forward.1} parent=0 // loop_footer
    %s14 = sadd.s32 1, %s10
  $region7: #{rebnconv_forward.1} parent=0 // loop_footer_branch
    %9 = sbr.rel target = $region3
  $region8: #{rebnconv_forward.1} parent=0 // loop_exit
    _

</llo_original>
